<compile_context>
chip_gen: v7x
topology: tpu7x:2x2x1
jax: 0.10.0
libtpu: 0.0.40
codegen_flags: <defaults>
</compile_context>

<pallas_src>
import functools
import math

import jax
import jax.numpy as jnp
from jax.experimental import pallas as pl
from jax.experimental.pallas import tpu as pltpu


CFG = dict(
    vocab_size=100,
    type_vocab_size=2,
    max_position=16,
    hidden=32,
    heads=2,
    intermediate=64,
    layers=2,
    num_category_labels=3,
    num_function_labels=4,
    num_usage_base_labels=5,
)


def _gelu_tanh(x):
    # TODO(synk): HF BERT default is erf-GELU; tanh approximation used (Mosaic-safe).
    c = math.sqrt(2.0 / math.pi)
    return 0.5 * x * (1.0 + jnp.tanh(c * (x + 0.044715 * x * x * x)))


# ----------------------------------------------------------------------------
# Fused whole-forward kernel (grid axis = batch blocks of Bblk elements)
# ----------------------------------------------------------------------------

def bert_forward_kernel(
    emb_ref, mask_ref, emb_ln_ref,
    qkv_w_ref, qkv_b_ref, o_w_ref, layer_vec_ref,
    i_w_ref, i_b_ref, f_w_ref,
    pool_w_ref, pool_b_ref, heads_w_ref, heads_b_ref,
    out_ref,
    *, num_layers, num_heads, hidden, seq, bblk):
    H = hidden
    S = seq
    dh = H // num_heads
    scale = 1.0 / math.sqrt(dh)
    M = bblk * S

    def layer_norm(x, g, b):
        mu = jnp.mean(x, axis=-1, keepdims=True)
        xc = x - mu
        var = jnp.mean(xc * xc, axis=-1, keepdims=True)
        return xc * jax.lax.rsqrt(var + 1e-12) * g + b

    def mm(a, w):
        # MXU matmul: bf16 inputs, f32 accumulation.
        return jnp.dot(a.astype(jnp.bfloat16), w,
                       preferred_element_type=jnp.float32)

    x = emb_ref[...].reshape(M, H)                      # (M, H) slab, f32
    add_mask = mask_ref[...]                            # (Bblk, 1, S) additive

    # --- embedding LayerNorm ---
    x = layer_norm(x, emb_ln_ref[0:1, :], emb_ln_ref[1:2, :])

    # TODO(synk): at real layer counts, stream weights over an "arbitrary" L
    # grid axis (or pltpu.emit_pipeline) instead of a resident stacked L axis.
    for l in range(num_layers):
        vec = layer_vec_ref[l]                          # (6, H) f32
        o_b, ln1_g, ln1_b = vec[0:1, :], vec[1:2, :], vec[2:3, :]
        f_b, ln2_g, ln2_b = vec[3:4, :], vec[4:5, :], vec[5:6, :]

        # --- self-attention: one fused QKV projection on the (M, H) slab ---
        qkv = mm(x, qkv_w_ref[l]) + qkv_b_ref[l]        # (M, 3H) f32
        qkv3 = qkv.reshape(bblk, S, 3 * H)

        ctx_heads = []
        for h in range(num_heads):
            q_h = qkv3[:, :, h * dh:(h + 1) * dh].astype(jnp.bfloat16)
            k_h = qkv3[:, :, H + h * dh:H + (h + 1) * dh].astype(jnp.bfloat16)
            v_h = qkv3[:, :, 2 * H + h * dh:2 * H + (h + 1) * dh].astype(jnp.bfloat16)
            s = jnp.einsum('bqd,bkd->bqk', q_h, k_h,
                           preferred_element_type=jnp.float32) * scale
            s = s + add_mask
            s = s - jnp.max(s, axis=-1, keepdims=True)
            p = jnp.exp(s)
            p = p * pl.reciprocal(jnp.sum(p, axis=-1, keepdims=True), approx=True)
            ctx_heads.append(
                jnp.einsum('bqk,bkd->bqd', p.astype(jnp.bfloat16), v_h,
                           preferred_element_type=jnp.float32))
        # concat heads along lanes -> ONE output projection for all heads
        ctx = jnp.concatenate(ctx_heads, axis=-1).reshape(M, H)
        attn_out = mm(ctx, o_w_ref[l]) + o_b
        x = layer_norm(x + attn_out, ln1_g, ln1_b)

        # --- feed-forward ---
        h1 = _gelu_tanh(mm(x, i_w_ref[l]) + i_b_ref[l])
        ffn = mm(h1, f_w_ref[l]) + f_b
        x = layer_norm(x + ffn, ln2_g, ln2_b)

    # --- pooler (CLS token per batch element) + fused, lane-padded heads ---
    cls = x.reshape(bblk, S, H)[:, 0:1, :].reshape(bblk, H)
    pooled = jnp.tanh(mm(cls, pool_w_ref[...]) + pool_b_ref[...])
    out_ref[...] = mm(pooled, heads_w_ref[...]) + heads_b_ref[...]   # (Bblk, 128)


# ----------------------------------------------------------------------------
# Parameters (synthetic; matmul weights bf16, biases/LN params f32, packed)
# ----------------------------------------------------------------------------

def init_params(key, cfg):
    H, I, L = cfg["hidden"], cfg["intermediate"], cfg["layers"]
    n_out = (cfg["num_category_labels"] + cfg["num_function_labels"]
             + cfg["num_usage_base_labels"])
    n_out_pad = max(128, ((n_out + 127) // 128) * 128)   # lane-dense output

    def nrm(k, shape, std=0.02):
        return std * jax.random.normal(k, shape, dtype=jnp.float32)

    keys = iter(jax.random.split(key, 16))

    heads_w = jnp.zeros((H, n_out_pad), jnp.float32)
    heads_w = heads_w.at[:, :n_out].set(nrm(next(keys), (H, n_out)))

    # packed per-layer vectors: [o_b, ln1_g, ln1_b, f_b, ln2_g, ln2_b]
    layer_vec = jnp.stack([
        jnp.zeros((L, H), jnp.float32),
        jnp.ones((L, H), jnp.float32),
        jnp.zeros((L, H), jnp.float32),
        jnp.zeros((L, H), jnp.float32),
        jnp.ones((L, H), jnp.float32),
        jnp.zeros((L, H), jnp.float32),
    ], axis=1)                                            # (L, 6, H)

    return {
        "word_emb": nrm(next(keys), (cfg["vocab_size"], H)),
        "pos_emb": nrm(next(keys), (cfg["max_position"], H)),
        "type_emb": nrm(next(keys), (cfg["type_vocab_size"], H)),
        "emb_ln": jnp.concatenate([jnp.ones((1, H), jnp.float32),
                                   jnp.zeros((1, H), jnp.float32)], axis=0),
        # fused QKV ([Q | K | V]) per layer, stacked on leading L axis
        "qkv_w": nrm(next(keys), (L, H, 3 * H)).astype(jnp.bfloat16),
        "qkv_b": jnp.zeros((L, 1, 3 * H), jnp.float32),
        "o_w": nrm(next(keys), (L, H, H)).astype(jnp.bfloat16),
        "layer_vec": layer_vec,
        "i_w": nrm(next(keys), (L, H, I)).astype(jnp.bfloat16),
        "i_b": jnp.zeros((L, 1, I), jnp.float32),
        "f_w": nrm(next(keys), (L, I, H)).astype(jnp.bfloat16),
        "pool_w": nrm(next(keys), (H, H)).astype(jnp.bfloat16),
        "pool_b": jnp.zeros((1, H), jnp.float32),
        # 3 task heads fused along output dim ([category | function | usage]),
        # zero-padded to 128 lanes for an unmasked store.
        "heads_w": heads_w.astype(jnp.bfloat16),
        "heads_b": jnp.zeros((1, n_out_pad), jnp.float32),
    }


# ----------------------------------------------------------------------------
# Forward wrapper (embedding gather in JAX; everything else in one pallas_call)
# ----------------------------------------------------------------------------

def _pick_bblk(B, S, target_m=256):
    # batch block: divisor of B with Bblk*S near the MXU M dim; the output
    # block's second-to-last dim must be a multiple of 8 or the full batch.
    divisors = [d for d in range(1, B + 1)
                if B % d == 0 and (d == B or d % 8 == 0)]
    fitting = [d for d in divisors if d * S <= max(S, target_m)]
    return max(fitting) if fitting else min(divisors)


def multi_task_bert_forward(params, input_ids, attention_mask, cfg):
    B, S = input_ids.shape
    H, I, L = cfg["hidden"], cfg["intermediate"], cfg["layers"]
    n_out = (cfg["num_category_labels"] + cfg["num_function_labels"]
             + cfg["num_usage_base_labels"])
    n_out_pad = params["heads_w"].shape[1]

    # --- embeddings (gather + sum is glue; LayerNorm is in-kernel) ---
    # TODO(synk): fold the gather in-kernel (scalar-prefetched input_ids + DMA
    # gather) at real sizes to avoid the (B, S, H) HBM round trip.
    word = jnp.take(params["word_emb"], input_ids, axis=0)           # (B, S, H)
    pos = params["pos_emb"][:S][None, :, :]
    tok = params["type_emb"][0][None, None, :]                       # token_type_ids = 0
    emb = (word + pos + tok).astype(jnp.float32)

    # extended additive attention mask, one (1, S) row per batch element
    ext_mask = ((1.0 - attention_mask.astype(jnp.float32)) * -10000.0)[:, None, :]

    bblk = _pick_bblk(B, S)
    grid = (B // bblk,)

    def wspec(shape):
        nd = len(shape)
        return pl.BlockSpec(shape, lambda b, _nd=nd: (0,) * _nd)

    kernel = functools.partial(
        bert_forward_kernel, num_layers=L, num_heads=cfg["heads"],
        hidden=H, seq=S, bblk=bblk)

    out = pl.pallas_call(
        kernel,
        out_shape=jax.ShapeDtypeStruct((B, n_out_pad), jnp.float32),
        grid=grid,
        in_specs=[
            pl.BlockSpec((bblk, S, H), lambda b: (b, 0, 0)),     # summed embeddings
            pl.BlockSpec((bblk, 1, S), lambda b: (b, 0, 0)),     # additive mask rows
            wspec((2, H)),                                       # emb LN gamma/beta
            wspec((L, H, 3 * H)), wspec((L, 1, 3 * H)),          # fused QKV w / b
            wspec((L, H, H)),                                    # attn output w
            wspec((L, 6, H)),                                    # packed per-layer vecs
            wspec((L, H, I)), wspec((L, 1, I)),                  # FFN in w / b
            wspec((L, I, H)),                                    # FFN out w
            wspec((H, H)), wspec((1, H)),                        # pooler w / b
            wspec((H, n_out_pad)), wspec((1, n_out_pad)),        # fused heads w / b
        ],
        out_specs=pl.BlockSpec((bblk, n_out_pad), lambda b: (b, 0)),
        compiler_params=pltpu.CompilerParams(
            dimension_semantics=("parallel",)),
    )(emb, ext_mask, params["emb_ln"],
      params["qkv_w"], params["qkv_b"], params["o_w"], params["layer_vec"],
      params["i_w"], params["i_b"], params["f_w"],
      params["pool_w"], params["pool_b"],
      params["heads_w"], params["heads_b"])

    nc = cfg["num_category_labels"]
    nf = cfg["num_function_labels"]
    return (out[:, :nc],                   # category_logits
            out[:, nc:nc + nf],            # function_logits
            out[:, nc + nf:n_out])         # usage_base_logits


# ----------------------------------------------------------------------------
# Main
# ----------------------------------------------------------------------------

if __name__ == "__main__":
    key = jax.random.PRNGKey(0)
    kp, ki = jax.random.split(key)

    params = init_params(kp, CFG)

    B, S = 2, 8
    input_ids = jax.random.randint(ki, (B, S), 0, CFG["vocab_size"], dtype=jnp.int32)
    attention_mask = jnp.ones((B, S), dtype=jnp.int32).at[1, 6:].set(0)

    fwd = jax.jit(lambda ids, msk: multi_task_bert_forward(params, ids, msk, CFG))
    cat, fn, usage = fwd(input_ids, attention_mask)
    jax.block_until_ready((cat, fn, usage))

    assert cat.shape == (B, CFG["num_category_labels"])
    assert fn.shape == (B, CFG["num_function_labels"])
    assert usage.shape == (B, CFG["num_usage_base_labels"])
    assert all(bool(jnp.all(jnp.isfinite(t))) for t in (cat, fn, usage))

    print("KERNEL_OK")
</pallas_src>

<mosaic_0001>
module attributes {stable_mosaic.version = 11 : i64} {
  func.func @bert_forward_kernel(%arg0: i32, %arg1: memref<2x8x32xf32, #tpu.memory_space<vmem>>, %arg2: memref<2x1x8xf32, #tpu.memory_space<vmem>>, %arg3: memref<2x32xf32, #tpu.memory_space<vmem>>, %arg4: memref<2x32x96xbf16, #tpu.memory_space<vmem>>, %arg5: memref<2x1x96xf32, #tpu.memory_space<vmem>>, %arg6: memref<2x32x32xbf16, #tpu.memory_space<vmem>>, %arg7: memref<2x6x32xf32, #tpu.memory_space<vmem>>, %arg8: memref<2x32x64xbf16, #tpu.memory_space<vmem>>, %arg9: memref<2x1x64xf32, #tpu.memory_space<vmem>>, %arg10: memref<2x64x32xbf16, #tpu.memory_space<vmem>>, %arg11: memref<32x32xbf16, #tpu.memory_space<vmem>>, %arg12: memref<1x32xf32, #tpu.memory_space<vmem>>, %arg13: memref<32x128xbf16, #tpu.memory_space<vmem>>, %arg14: memref<1x128xf32, #tpu.memory_space<vmem>>, %arg15: memref<2x128xf32, #tpu.memory_space<vmem>>) attributes {dimension_semantics = [#tpu.dimension_semantics<parallel>], iteration_bounds = array<i64: 1>, scalar_prefetch = 0 : i64, scratch_operands = 0 : i64, tpu.core_type = #tpu.core_type<tc>, window_params = [{transform_indices = @transform_0, window_bounds = array<i64: 2, 8, 32>}, {transform_indices = @transform_1, window_bounds = array<i64: 2, 1, 8>}, {pipeline_mode = #tpu.pipeline_mode<synchronous>, transform_indices = @transform_2, window_bounds = array<i64: 2, 32>}, {pipeline_mode = #tpu.pipeline_mode<synchronous>, transform_indices = @transform_3, window_bounds = array<i64: 2, 32, 96>}, {pipeline_mode = #tpu.pipeline_mode<synchronous>, transform_indices = @transform_4, window_bounds = array<i64: 2, 1, 96>}, {pipeline_mode = #tpu.pipeline_mode<synchronous>, transform_indices = @transform_5, window_bounds = array<i64: 2, 32, 32>}, {pipeline_mode = #tpu.pipeline_mode<synchronous>, transform_indices = @transform_6, window_bounds = array<i64: 2, 6, 32>}, {pipeline_mode = #tpu.pipeline_mode<synchronous>, transform_indices = @transform_7, window_bounds = array<i64: 2, 32, 64>}, {pipeline_mode = #tpu.pipeline_mode<synchronous>, transform_indices = @transform_8, window_bounds = array<i64: 2, 1, 64>}, {pipeline_mode = #tpu.pipeline_mode<synchronous>, transform_indices = @transform_9, window_bounds = array<i64: 2, 64, 32>}, {pipeline_mode = #tpu.pipeline_mode<synchronous>, transform_indices = @transform_10, window_bounds = array<i64: 32, 32>}, {pipeline_mode = #tpu.pipeline_mode<synchronous>, transform_indices = @transform_11, window_bounds = array<i64: 1, 32>}, {pipeline_mode = #tpu.pipeline_mode<synchronous>, transform_indices = @transform_12, window_bounds = array<i64: 32, 128>}, {pipeline_mode = #tpu.pipeline_mode<synchronous>, transform_indices = @transform_13, window_bounds = array<i64: 1, 128>}, {transform_indices = @transform_14, window_bounds = array<i64: 2, 128>}]} {
    %c0 = arith.constant 0 : index
    %c0_0 = arith.constant 0 : index
    %c0_1 = arith.constant 0 : index
    %0 = vector.load %arg1[%c0, %c0_0, %c0_1] : memref<2x8x32xf32, #tpu.memory_space<vmem>>, vector<2x8x32xf32>
    %1 = vector.shape_cast %0 : vector<2x8x32xf32> to vector<16x32xf32>
    %c0_2 = arith.constant 0 : index
    %c0_3 = arith.constant 0 : index
    %c0_4 = arith.constant 0 : index
    %2 = vector.load %arg2[%c0_2, %c0_3, %c0_4] : memref<2x1x8xf32, #tpu.memory_space<vmem>>, vector<2x1x8xf32>
    %c0_5 = arith.constant 0 : index
    %c0_6 = arith.constant 0 : index
    %3 = vector.load %arg3[%c0_5, %c0_6] : memref<2x32xf32, #tpu.memory_space<vmem>>, vector<1x32xf32>
    %c1 = arith.constant 1 : index
    %c0_7 = arith.constant 0 : index
    %4 = vector.load %arg3[%c1, %c0_7] : memref<2x32xf32, #tpu.memory_space<vmem>>, vector<1x32xf32>
    %cst = arith.constant dense<0.000000e+00> : vector<16xf32>
    %5 = vector.multi_reduction <add>, %1, %cst [1] : vector<16x32xf32> to vector<16xf32>
    %6 = vector.shape_cast %5 : vector<16xf32> to vector<16x1xf32>
    %cst_8 = arith.constant 3.200000e+01 : f32
    %7 = vector.broadcast %cst_8 : f32 to vector<16x1xf32>
    %8 = arith.divf %6, %7 : vector<16x1xf32>
    %9 = vector.broadcast %8 : vector<16x1xf32> to vector<16x32xf32>
    %10 = arith.subf %1, %9 : vector<16x32xf32>
    %11 = arith.mulf %10, %10 : vector<16x32xf32>
    %cst_9 = arith.constant dense<0.000000e+00> : vector<16xf32>
    %12 = vector.multi_reduction <add>, %11, %cst_9 [1] : vector<16x32xf32> to vector<16xf32>
    %13 = vector.shape_cast %12 : vector<16xf32> to vector<16x1xf32>
    %cst_10 = arith.constant 3.200000e+01 : f32
    %14 = vector.broadcast %cst_10 : f32 to vector<16x1xf32>
    %15 = arith.divf %13, %14 : vector<16x1xf32>
    %cst_11 = arith.constant 9.99999996E-13 : f32
    %16 = vector.broadcast %cst_11 : f32 to vector<16x1xf32>
    %17 = arith.addf %15, %16 : vector<16x1xf32>
    %18 = math.rsqrt %17 : vector<16x1xf32>
    %19 = vector.broadcast %18 : vector<16x1xf32> to vector<16x32xf32>
    %20 = arith.mulf %10, %19 : vector<16x32xf32>
    %21 = vector.broadcast %3 : vector<1x32xf32> to vector<16x32xf32>
    %22 = arith.mulf %20, %21 : vector<16x32xf32>
    %23 = vector.broadcast %4 : vector<1x32xf32> to vector<16x32xf32>
    %24 = arith.addf %22, %23 : vector<16x32xf32>
    %c0_12 = arith.constant 0 : index
    %c0_13 = arith.constant 0 : index
    %c0_14 = arith.constant 0 : index
    %25 = vector.load %arg7[%c0_12, %c0_13, %c0_14] : memref<2x6x32xf32, #tpu.memory_space<vmem>>, vector<1x6x32xf32>
    %26 = vector.shape_cast %25 : vector<1x6x32xf32> to vector<6x32xf32>
    %27 = vector.extract_strided_slice %26 {offsets = [0, 0], sizes = [1, 32], strides = [1, 1]} : vector<6x32xf32> to vector<1x32xf32>
    %28 = vector.extract_strided_slice %26 {offsets = [1, 0], sizes = [1, 32], strides = [1, 1]} : vector<6x32xf32> to vector<1x32xf32>
    %29 = vector.extract_strided_slice %26 {offsets = [2, 0], sizes = [1, 32], strides = [1, 1]} : vector<6x32xf32> to vector<1x32xf32>
    %30 = vector.extract_strided_slice %26 {offsets = [3, 0], sizes = [1, 32], strides = [1, 1]} : vector<6x32xf32> to vector<1x32xf32>
    %31 = vector.extract_strided_slice %26 {offsets = [4, 0], sizes = [1, 32], strides = [1, 1]} : vector<6x32xf32> to vector<1x32xf32>
    %32 = vector.extract_strided_slice %26 {offsets = [5, 0], sizes = [1, 32], strides = [1, 1]} : vector<6x32xf32> to vector<1x32xf32>
    %c0_15 = arith.constant 0 : index
    %c0_16 = arith.constant 0 : index
    %c0_17 = arith.constant 0 : index
    %33 = vector.load %arg4[%c0_15, %c0_16, %c0_17] : memref<2x32x96xbf16, #tpu.memory_space<vmem>>, vector<1x32x96xbf16>
    %34 = vector.shape_cast %33 : vector<1x32x96xbf16> to vector<32x96xbf16>
    %35 = arith.truncf %24 : vector<16x32xf32> to vector<16x32xbf16>
    %cst_18 = arith.constant dense<0.000000e+00> : vector<16x96xf32>
    %36 = tpu.matmul %35, %34, %cst_18 {dimension_numbers = #tpu.dot_dimension_numbers<[1], [0], [0], [1], [0, 0, 1, 1], [], []>} : vector<16x32xbf16>, vector<32x96xbf16>, vector<16x96xf32> -> vector<16x96xf32>
    %c0_19 = arith.constant 0 : index
    %c0_20 = arith.constant 0 : index
    %c0_21 = arith.constant 0 : index
    %37 = vector.load %arg5[%c0_19, %c0_20, %c0_21] : memref<2x1x96xf32, #tpu.memory_space<vmem>>, vector<1x1x96xf32>
    %38 = vector.shape_cast %37 : vector<1x1x96xf32> to vector<1x96xf32>
    %39 = vector.broadcast %38 : vector<1x96xf32> to vector<16x96xf32>
    %40 = arith.addf %36, %39 : vector<16x96xf32>
    %41 = vector.shape_cast %40 : vector<16x96xf32> to vector<2x8x96xf32>
    %42 = vector.extract_strided_slice %41 {offsets = [0, 0, 0], sizes = [2, 8, 16], strides = [1, 1, 1]} : vector<2x8x96xf32> to vector<2x8x16xf32>
    %43 = arith.truncf %42 : vector<2x8x16xf32> to vector<2x8x16xbf16>
    %44 = vector.extract_strided_slice %41 {offsets = [0, 0, 32], sizes = [2, 8, 16], strides = [1, 1, 1]} : vector<2x8x96xf32> to vector<2x8x16xf32>
    %45 = arith.truncf %44 : vector<2x8x16xf32> to vector<2x8x16xbf16>
    %46 = vector.extract_strided_slice %41 {offsets = [0, 0, 64], sizes = [2, 8, 16], strides = [1, 1, 1]} : vector<2x8x96xf32> to vector<2x8x16xf32>
    %47 = arith.truncf %46 : vector<2x8x16xf32> to vector<2x8x16xbf16>
    "tpu.trace_start"() <{level = 10 : i32, message = "bqd,bkd->bqk"}> : () -> ()
    %cst_22 = arith.constant dense<0.000000e+00> : vector<2x8x8xf32>
    %48 = tpu.matmul %43, %45, %cst_22 {dimension_numbers = #tpu.dot_dimension_numbers<[2], [2], [1], [1], [0, 0, 0, 1, 1, 1], [0], [0]>} : vector<2x8x16xbf16>, vector<2x8x16xbf16>, vector<2x8x8xf32> -> vector<2x8x8xf32>
    "tpu.trace_stop"() : () -> ()
    %cst_23 = arith.constant 2.500000e-01 : f32
    %49 = vector.broadcast %cst_23 : f32 to vector<2x8x8xf32>
    %50 = arith.mulf %48, %49 : vector<2x8x8xf32>
    %51 = vector.broadcast %2 : vector<2x1x8xf32> to vector<2x8x8xf32>
    %52 = arith.addf %50, %51 : vector<2x8x8xf32>
    %cst_24 = arith.constant dense<0xFF800000> : vector<2x8xf32>
    %53 = vector.multi_reduction <maximumf>, %52, %cst_24 [2] : vector<2x8x8xf32> to vector<2x8xf32>
    %54 = vector.shape_cast %53 : vector<2x8xf32> to vector<2x8x1xf32>
    %55 = vector.broadcast %54 : vector<2x8x1xf32> to vector<2x8x8xf32>
    %56 = arith.subf %52, %55 : vector<2x8x8xf32>
    %57 = math.exp %56 : vector<2x8x8xf32>
    %cst_25 = arith.constant dense<0.000000e+00> : vector<2x8xf32>
    %58 = vector.multi_reduction <add>, %57, %cst_25 [2] : vector<2x8x8xf32> to vector<2x8xf32>
    %59 = vector.shape_cast %58 : vector<2x8xf32> to vector<2x8x1xf32>
    %60 = tpu.reciprocal %59 {approx = true} : vector<2x8x1xf32> -> vector<2x8x1xf32>
    %61 = vector.broadcast %60 : vector<2x8x1xf32> to vector<2x8x8xf32>
    %62 = arith.mulf %57, %61 : vector<2x8x8xf32>
    %63 = arith.truncf %62 : vector<2x8x8xf32> to vector<2x8x8xbf16>
    "tpu.trace_start"() <{level = 10 : i32, message = "bqk,bkd->bqd"}> : () -> ()
    %cst_26 = arith.constant dense<0.000000e+00> : vector<2x8x16xf32>
    %64 = tpu.matmul %63, %47, %cst_26 {dimension_numbers = #tpu.dot_dimension_numbers<[2], [1], [1], [2], [0, 0, 0, 1, 1, 2], [0], [0]>} : vector<2x8x8xbf16>, vector<2x8x16xbf16>, vector<2x8x16xf32> -> vector<2x8x16xf32>
    "tpu.trace_stop"() : () -> ()
    %65 = vector.extract_strided_slice %41 {offsets = [0, 0, 16], sizes = [2, 8, 16], strides = [1, 1, 1]} : vector<2x8x96xf32> to vector<2x8x16xf32>
    %66 = arith.truncf %65 : vector<2x8x16xf32> to vector<2x8x16xbf16>
    %67 = vector.extract_strided_slice %41 {offsets = [0, 0, 48], sizes = [2, 8, 16], strides = [1, 1, 1]} : vector<2x8x96xf32> to vector<2x8x16xf32>
    %68 = arith.truncf %67 : vector<2x8x16xf32> to vector<2x8x16xbf16>
    %69 = vector.extract_strided_slice %41 {offsets = [0, 0, 80], sizes = [2, 8, 16], strides = [1, 1, 1]} : vector<2x8x96xf32> to vector<2x8x16xf32>
    %70 = arith.truncf %69 : vector<2x8x16xf32> to vector<2x8x16xbf16>
    "tpu.trace_start"() <{level = 10 : i32, message = "bqd,bkd->bqk"}> : () -> ()
    %cst_27 = arith.constant dense<0.000000e+00> : vector<2x8x8xf32>
    %71 = tpu.matmul %66, %68, %cst_27 {dimension_numbers = #tpu.dot_dimension_numbers<[2], [2], [1], [1], [0, 0, 0, 1, 1, 1], [0], [0]>} : vector<2x8x16xbf16>, vector<2x8x16xbf16>, vector<2x8x8xf32> -> vector<2x8x8xf32>
    "tpu.trace_stop"() : () -> ()
    %cst_28 = arith.constant 2.500000e-01 : f32
    %72 = vector.broadcast %cst_28 : f32 to vector<2x8x8xf32>
    %73 = arith.mulf %71, %72 : vector<2x8x8xf32>
    %74 = vector.broadcast %2 : vector<2x1x8xf32> to vector<2x8x8xf32>
    %75 = arith.addf %73, %74 : vector<2x8x8xf32>
    %cst_29 = arith.constant dense<0xFF800000> : vector<2x8xf32>
    %76 = vector.multi_reduction <maximumf>, %75, %cst_29 [2] : vector<2x8x8xf32> to vector<2x8xf32>
    %77 = vector.shape_cast %76 : vector<2x8xf32> to vector<2x8x1xf32>
    %78 = vector.broadcast %77 : vector<2x8x1xf32> to vector<2x8x8xf32>
    %79 = arith.subf %75, %78 : vector<2x8x8xf32>
    %80 = math.exp %79 : vector<2x8x8xf32>
    %cst_30 = arith.constant dense<0.000000e+00> : vector<2x8xf32>
    %81 = vector.multi_reduction <add>, %80, %cst_30 [2] : vector<2x8x8xf32> to vector<2x8xf32>
    %82 = vector.shape_cast %81 : vector<2x8xf32> to vector<2x8x1xf32>
    %83 = tpu.reciprocal %82 {approx = true} : vector<2x8x1xf32> -> vector<2x8x1xf32>
    %84 = vector.broadcast %83 : vector<2x8x1xf32> to vector<2x8x8xf32>
    %85 = arith.mulf %80, %84 : vector<2x8x8xf32>
    %86 = arith.truncf %85 : vector<2x8x8xf32> to vector<2x8x8xbf16>
    "tpu.trace_start"() <{level = 10 : i32, message = "bqk,bkd->bqd"}> : () -> ()
    %cst_31 = arith.constant dense<0.000000e+00> : vector<2x8x16xf32>
    %87 = tpu.matmul %86, %70, %cst_31 {dimension_numbers = #tpu.dot_dimension_numbers<[2], [1], [1], [2], [0, 0, 0, 1, 1, 2], [0], [0]>} : vector<2x8x8xbf16>, vector<2x8x16xbf16>, vector<2x8x16xf32> -> vector<2x8x16xf32>
    "tpu.trace_stop"() : () -> ()
    %88 = tpu.concatenate %64, %87 in 2 : vector<2x8x16xf32>, vector<2x8x16xf32> -> vector<2x8x32xf32>
    %89 = vector.shape_cast %88 : vector<2x8x32xf32> to vector<16x32xf32>
    %c0_32 = arith.constant 0 : index
    %c0_33 = arith.constant 0 : index
    %c0_34 = arith.constant 0 : index
    %90 = vector.load %arg6[%c0_32, %c0_33, %c0_34] : memref<2x32x32xbf16, #tpu.memory_space<vmem>>, vector<1x32x32xbf16>
    %91 = vector.shape_cast %90 : vector<1x32x32xbf16> to vector<32x32xbf16>
    %92 = arith.truncf %89 : vector<16x32xf32> to vector<16x32xbf16>
    %cst_35 = arith.constant dense<0.000000e+00> : vector<16x32xf32>
    %93 = tpu.matmul %92, %91, %cst_35 {dimension_numbers = #tpu.dot_dimension_numbers<[1], [0], [0], [1], [0, 0, 1, 1], [], []>} : vector<16x32xbf16>, vector<32x32xbf16>, vector<16x32xf32> -> vector<16x32xf32>
    %94 = vector.broadcast %27 : vector<1x32xf32> to vector<16x32xf32>
    %95 = arith.addf %93, %94 : vector<16x32xf32>
    %96 = arith.addf %24, %95 : vector<16x32xf32>
    %cst_36 = arith.constant dense<0.000000e+00> : vector<16xf32>
    %97 = vector.multi_reduction <add>, %96, %cst_36 [1] : vector<16x32xf32> to vector<16xf32>
    %98 = vector.shape_cast %97 : vector<16xf32> to vector<16x1xf32>
    %cst_37 = arith.constant 3.200000e+01 : f32
    %99 = vector.broadcast %cst_37 : f32 to vector<16x1xf32>
    %100 = arith.divf %98, %99 : vector<16x1xf32>
    %101 = vector.broadcast %100 : vector<16x1xf32> to vector<16x32xf32>
    %102 = arith.subf %96, %101 : vector<16x32xf32>
    %103 = arith.mulf %102, %102 : vector<16x32xf32>
    %cst_38 = arith.constant dense<0.000000e+00> : vector<16xf32>
    %104 = vector.multi_reduction <add>, %103, %cst_38 [1] : vector<16x32xf32> to vector<16xf32>
    %105 = vector.shape_cast %104 : vector<16xf32> to vector<16x1xf32>
    %cst_39 = arith.constant 3.200000e+01 : f32
    %106 = vector.broadcast %cst_39 : f32 to vector<16x1xf32>
    %107 = arith.divf %105, %106 : vector<16x1xf32>
    %cst_40 = arith.constant 9.99999996E-13 : f32
    %108 = vector.broadcast %cst_40 : f32 to vector<16x1xf32>
    %109 = arith.addf %107, %108 : vector<16x1xf32>
    %110 = math.rsqrt %109 : vector<16x1xf32>
    %111 = vector.broadcast %110 : vector<16x1xf32> to vector<16x32xf32>
    %112 = arith.mulf %102, %111 : vector<16x32xf32>
    %113 = vector.broadcast %28 : vector<1x32xf32> to vector<16x32xf32>
    %114 = arith.mulf %112, %113 : vector<16x32xf32>
    %115 = vector.broadcast %29 : vector<1x32xf32> to vector<16x32xf32>
    %116 = arith.addf %114, %115 : vector<16x32xf32>
    %c0_41 = arith.constant 0 : index
    %c0_42 = arith.constant 0 : index
    %c0_43 = arith.constant 0 : index
    %117 = vector.load %arg8[%c0_41, %c0_42, %c0_43] : memref<2x32x64xbf16, #tpu.memory_space<vmem>>, vector<1x32x64xbf16>
    %118 = vector.shape_cast %117 : vector<1x32x64xbf16> to vector<32x64xbf16>
    %119 = arith.truncf %116 : vector<16x32xf32> to vector<16x32xbf16>
    %cst_44 = arith.constant dense<0.000000e+00> : vector<16x64xf32>
    %120 = tpu.matmul %119, %118, %cst_44 {dimension_numbers = #tpu.dot_dimension_numbers<[1], [0], [0], [1], [0, 0, 1, 1], [], []>} : vector<16x32xbf16>, vector<32x64xbf16>, vector<16x64xf32> -> vector<16x64xf32>
    %c0_45 = arith.constant 0 : index
    %c0_46 = arith.constant 0 : index
    %c0_47 = arith.constant 0 : index
    %121 = vector.load %arg9[%c0_45, %c0_46, %c0_47] : memref<2x1x64xf32, #tpu.memory_space<vmem>>, vector<1x1x64xf32>
    %122 = vector.shape_cast %121 : vector<1x1x64xf32> to vector<1x64xf32>
    %123 = vector.broadcast %122 : vector<1x64xf32> to vector<16x64xf32>
    %124 = arith.addf %120, %123 : vector<16x64xf32>
    %cst_48 = arith.constant 5.000000e-01 : f32
    %125 = vector.broadcast %cst_48 : f32 to vector<16x64xf32>
    %126 = arith.mulf %125, %124 : vector<16x64xf32>
    %cst_49 = arith.constant 4.471500e-02 : f32
    %127 = vector.broadcast %cst_49 : f32 to vector<16x64xf32>
    %128 = arith.mulf %127, %124 : vector<16x64xf32>
    %129 = arith.mulf %128, %124 : vector<16x64xf32>
    %130 = arith.mulf %129, %124 : vector<16x64xf32>
    %131 = arith.addf %124, %130 : vector<16x64xf32>
    %cst_50 = arith.constant 0.797884583 : f32
    %132 = vector.broadcast %cst_50 : f32 to vector<16x64xf32>
    %133 = arith.mulf %132, %131 : vector<16x64xf32>
    %134 = math.tanh %133 : vector<16x64xf32>
    %cst_51 = arith.constant 1.000000e+00 : f32
    %135 = vector.broadcast %cst_51 : f32 to vector<16x64xf32>
    %136 = arith.addf %135, %134 : vector<16x64xf32>
    %137 = arith.mulf %126, %136 : vector<16x64xf32>
    %c0_52 = arith.constant 0 : index
    %c0_53 = arith.constant 0 : index
    %c0_54 = arith.constant 0 : index
    %138 = vector.load %arg10[%c0_52, %c0_53, %c0_54] : memref<2x64x32xbf16, #tpu.memory_space<vmem>>, vector<1x64x32xbf16>
    %139 = vector.shape_cast %138 : vector<1x64x32xbf16> to vector<64x32xbf16>
    %140 = arith.truncf %137 : vector<16x64xf32> to vector<16x64xbf16>
    %cst_55 = arith.constant dense<0.000000e+00> : vector<16x32xf32>
    %141 = tpu.matmul %140, %139, %cst_55 {dimension_numbers = #tpu.dot_dimension_numbers<[1], [0], [0], [1], [0, 0, 1, 1], [], []>} : vector<16x64xbf16>, vector<64x32xbf16>, vector<16x32xf32> -> vector<16x32xf32>
    %142 = vector.broadcast %30 : vector<1x32xf32> to vector<16x32xf32>
    %143 = arith.addf %141, %142 : vector<16x32xf32>
    %144 = arith.addf %116, %143 : vector<16x32xf32>
    %cst_56 = arith.constant dense<0.000000e+00> : vector<16xf32>
    %145 = vector.multi_reduction <add>, %144, %cst_56 [1] : vector<16x32xf32> to vector<16xf32>
    %146 = vector.shape_cast %145 : vector<16xf32> to vector<16x1xf32>
    %cst_57 = arith.constant 3.200000e+01 : f32
    %147 = vector.broadcast %cst_57 : f32 to vector<16x1xf32>
    %148 = arith.divf %146, %147 : vector<16x1xf32>
    %149 = vector.broadcast %148 : vector<16x1xf32> to vector<16x32xf32>
    %150 = arith.subf %144, %149 : vector<16x32xf32>
    %151 = arith.mulf %150, %150 : vector<16x32xf32>
    %cst_58 = arith.constant dense<0.000000e+00> : vector<16xf32>
    %152 = vector.multi_reduction <add>, %151, %cst_58 [1] : vector<16x32xf32> to vector<16xf32>
    %153 = vector.shape_cast %152 : vector<16xf32> to vector<16x1xf32>
    %cst_59 = arith.constant 3.200000e+01 : f32
    %154 = vector.broadcast %cst_59 : f32 to vector<16x1xf32>
    %155 = arith.divf %153, %154 : vector<16x1xf32>
    %cst_60 = arith.constant 9.99999996E-13 : f32
    %156 = vector.broadcast %cst_60 : f32 to vector<16x1xf32>
    %157 = arith.addf %155, %156 : vector<16x1xf32>
    %158 = math.rsqrt %157 : vector<16x1xf32>
    %159 = vector.broadcast %158 : vector<16x1xf32> to vector<16x32xf32>
    %160 = arith.mulf %150, %159 : vector<16x32xf32>
    %161 = vector.broadcast %31 : vector<1x32xf32> to vector<16x32xf32>
    %162 = arith.mulf %160, %161 : vector<16x32xf32>
    %163 = vector.broadcast %32 : vector<1x32xf32> to vector<16x32xf32>
    %164 = arith.addf %162, %163 : vector<16x32xf32>
    %c1_61 = arith.constant 1 : index
    %c0_62 = arith.constant 0 : index
    %c0_63 = arith.constant 0 : index
    %165 = vector.load %arg7[%c1_61, %c0_62, %c0_63] : memref<2x6x32xf32, #tpu.memory_space<vmem>>, vector<1x6x32xf32>
    %166 = vector.shape_cast %165 : vector<1x6x32xf32> to vector<6x32xf32>
    %167 = vector.extract_strided_slice %166 {offsets = [0, 0], sizes = [1, 32], strides = [1, 1]} : vector<6x32xf32> to vector<1x32xf32>
    %168 = vector.extract_strided_slice %166 {offsets = [1, 0], sizes = [1, 32], strides = [1, 1]} : vector<6x32xf32> to vector<1x32xf32>
    %169 = vector.extract_strided_slice %166 {offsets = [2, 0], sizes = [1, 32], strides = [1, 1]} : vector<6x32xf32> to vector<1x32xf32>
    %170 = vector.extract_strided_slice %166 {offsets = [3, 0], sizes = [1, 32], strides = [1, 1]} : vector<6x32xf32> to vector<1x32xf32>
    %171 = vector.extract_strided_slice %166 {offsets = [4, 0], sizes = [1, 32], strides = [1, 1]} : vector<6x32xf32> to vector<1x32xf32>
    %172 = vector.extract_strided_slice %166 {offsets = [5, 0], sizes = [1, 32], strides = [1, 1]} : vector<6x32xf32> to vector<1x32xf32>
    %c1_64 = arith.constant 1 : index
    %c0_65 = arith.constant 0 : index
    %c0_66 = arith.constant 0 : index
    %173 = vector.load %arg4[%c1_64, %c0_65, %c0_66] : memref<2x32x96xbf16, #tpu.memory_space<vmem>>, vector<1x32x96xbf16>
    %174 = vector.shape_cast %173 : vector<1x32x96xbf16> to vector<32x96xbf16>
    %175 = arith.truncf %164 : vector<16x32xf32> to vector<16x32xbf16>
    %cst_67 = arith.constant dense<0.000000e+00> : vector<16x96xf32>
    %176 = tpu.matmul %175, %174, %cst_67 {dimension_numbers = #tpu.dot_dimension_numbers<[1], [0], [0], [1], [0, 0, 1, 1], [], []>} : vector<16x32xbf16>, vector<32x96xbf16>, vector<16x96xf32> -> vector<16x96xf32>
    %c1_68 = arith.constant 1 : index
    %c0_69 = arith.constant 0 : index
    %c0_70 = arith.constant 0 : index
    %177 = vector.load %arg5[%c1_68, %c0_69, %c0_70] : memref<2x1x96xf32, #tpu.memory_space<vmem>>, vector<1x1x96xf32>
    %178 = vector.shape_cast %177 : vector<1x1x96xf32> to vector<1x96xf32>
    %179 = vector.broadcast %178 : vector<1x96xf32> to vector<16x96xf32>
    %180 = arith.addf %176, %179 : vector<16x96xf32>
    %181 = vector.shape_cast %180 : vector<16x96xf32> to vector<2x8x96xf32>
    %182 = vector.extract_strided_slice %181 {offsets = [0, 0, 0], sizes = [2, 8, 16], strides = [1, 1, 1]} : vector<2x8x96xf32> to vector<2x8x16xf32>
    %183 = arith.truncf %182 : vector<2x8x16xf32> to vector<2x8x16xbf16>
    %184 = vector.extract_strided_slice %181 {offsets = [0, 0, 32], sizes = [2, 8, 16], strides = [1, 1, 1]} : vector<2x8x96xf32> to vector<2x8x16xf32>
    %185 = arith.truncf %184 : vector<2x8x16xf32> to vector<2x8x16xbf16>
    %186 = vector.extract_strided_slice %181 {offsets = [0, 0, 64], sizes = [2, 8, 16], strides = [1, 1, 1]} : vector<2x8x96xf32> to vector<2x8x16xf32>
    %187 = arith.truncf %186 : vector<2x8x16xf32> to vector<2x8x16xbf16>
    "tpu.trace_start"() <{level = 10 : i32, message = "bqd,bkd->bqk"}> : () -> ()
    %cst_71 = arith.constant dense<0.000000e+00> : vector<2x8x8xf32>
    %188 = tpu.matmul %183, %185, %cst_71 {dimension_numbers = #tpu.dot_dimension_numbers<[2], [2], [1], [1], [0, 0, 0, 1, 1, 1], [0], [0]>} : vector<2x8x16xbf16>, vector<2x8x16xbf16>, vector<2x8x8xf32> -> vector<2x8x8xf32>
    "tpu.trace_stop"() : () -> ()
    %cst_72 = arith.constant 2.500000e-01 : f32
    %189 = vector.broadcast %cst_72 : f32 to vector<2x8x8xf32>
    %190 = arith.mulf %188, %189 : vector<2x8x8xf32>
    %191 = vector.broadcast %2 : vector<2x1x8xf32> to vector<2x8x8xf32>
    %192 = arith.addf %190, %191 : vector<2x8x8xf32>
    %cst_73 = arith.constant dense<0xFF800000> : vector<2x8xf32>
    %193 = vector.multi_reduction <maximumf>, %192, %cst_73 [2] : vector<2x8x8xf32> to vector<2x8xf32>
    %194 = vector.shape_cast %193 : vector<2x8xf32> to vector<2x8x1xf32>
    %195 = vector.broadcast %194 : vector<2x8x1xf32> to vector<2x8x8xf32>
    %196 = arith.subf %192, %195 : vector<2x8x8xf32>
    %197 = math.exp %196 : vector<2x8x8xf32>
    %cst_74 = arith.constant dense<0.000000e+00> : vector<2x8xf32>
    %198 = vector.multi_reduction <add>, %197, %cst_74 [2] : vector<2x8x8xf32> to vector<2x8xf32>
    %199 = vector.shape_cast %198 : vector<2x8xf32> to vector<2x8x1xf32>
    %200 = tpu.reciprocal %199 {approx = true} : vector<2x8x1xf32> -> vector<2x8x1xf32>
    %201 = vector.broadcast %200 : vector<2x8x1xf32> to vector<2x8x8xf32>
    %202 = arith.mulf %197, %201 : vector<2x8x8xf32>
    %203 = arith.truncf %202 : vector<2x8x8xf32> to vector<2x8x8xbf16>
    "tpu.trace_start"() <{level = 10 : i32, message = "bqk,bkd->bqd"}> : () -> ()
    %cst_75 = arith.constant dense<0.000000e+00> : vector<2x8x16xf32>
    %204 = tpu.matmul %203, %187, %cst_75 {dimension_numbers = #tpu.dot_dimension_numbers<[2], [1], [1], [2], [0, 0, 0, 1, 1, 2], [0], [0]>} : vector<2x8x8xbf16>, vector<2x8x16xbf16>, vector<2x8x16xf32> -> vector<2x8x16xf32>
    "tpu.trace_stop"() : () -> ()
    %205 = vector.extract_strided_slice %181 {offsets = [0, 0, 16], sizes = [2, 8, 16], strides = [1, 1, 1]} : vector<2x8x96xf32> to vector<2x8x16xf32>
    %206 = arith.truncf %205 : vector<2x8x16xf32> to vector<2x8x16xbf16>
    %207 = vector.extract_strided_slice %181 {offsets = [0, 0, 48], sizes = [2, 8, 16], strides = [1, 1, 1]} : vector<2x8x96xf32> to vector<2x8x16xf32>
    %208 = arith.truncf %207 : vector<2x8x16xf32> to vector<2x8x16xbf16>
    %209 = vector.extract_strided_slice %181 {offsets = [0, 0, 80], sizes = [2, 8, 16], strides = [1, 1, 1]} : vector<2x8x96xf32> to vector<2x8x16xf32>
    %210 = arith.truncf %209 : vector<2x8x16xf32> to vector<2x8x16xbf16>
    "tpu.trace_start"() <{level = 10 : i32, message = "bqd,bkd->bqk"}> : () -> ()
    %cst_76 = arith.constant dense<0.000000e+00> : vector<2x8x8xf32>
    %211 = tpu.matmul %206, %208, %cst_76 {dimension_numbers = #tpu.dot_dimension_numbers<[2], [2], [1], [1], [0, 0, 0, 1, 1, 1], [0], [0]>} : vector<2x8x16xbf16>, vector<2x8x16xbf16>, vector<2x8x8xf32> -> vector<2x8x8xf32>
    "tpu.trace_stop"() : () -> ()
    %cst_77 = arith.constant 2.500000e-01 : f32
    %212 = vector.broadcast %cst_77 : f32 to vector<2x8x8xf32>
    %213 = arith.mulf %211, %212 : vector<2x8x8xf32>
    %214 = vector.broadcast %2 : vector<2x1x8xf32> to vector<2x8x8xf32>
    %215 = arith.addf %213, %214 : vector<2x8x8xf32>
    %cst_78 = arith.constant dense<0xFF800000> : vector<2x8xf32>
    %216 = vector.multi_reduction <maximumf>, %215, %cst_78 [2] : vector<2x8x8xf32> to vector<2x8xf32>
    %217 = vector.shape_cast %216 : vector<2x8xf32> to vector<2x8x1xf32>
    %218 = vector.broadcast %217 : vector<2x8x1xf32> to vector<2x8x8xf32>
    %219 = arith.subf %215, %218 : vector<2x8x8xf32>
    %220 = math.exp %219 : vector<2x8x8xf32>
    %cst_79 = arith.constant dense<0.000000e+00> : vector<2x8xf32>
    %221 = vector.multi_reduction <add>, %220, %cst_79 [2] : vector<2x8x8xf32> to vector<2x8xf32>
    %222 = vector.shape_cast %221 : vector<2x8xf32> to vector<2x8x1xf32>
    %223 = tpu.reciprocal %222 {approx = true} : vector<2x8x1xf32> -> vector<2x8x1xf32>
    %224 = vector.broadcast %223 : vector<2x8x1xf32> to vector<2x8x8xf32>
    %225 = arith.mulf %220, %224 : vector<2x8x8xf32>
    %226 = arith.truncf %225 : vector<2x8x8xf32> to vector<2x8x8xbf16>
    "tpu.trace_start"() <{level = 10 : i32, message = "bqk,bkd->bqd"}> : () -> ()
    %cst_80 = arith.constant dense<0.000000e+00> : vector<2x8x16xf32>
    %227 = tpu.matmul %226, %210, %cst_80 {dimension_numbers = #tpu.dot_dimension_numbers<[2], [1], [1], [2], [0, 0, 0, 1, 1, 2], [0], [0]>} : vector<2x8x8xbf16>, vector<2x8x16xbf16>, vector<2x8x16xf32> -> vector<2x8x16xf32>
    "tpu.trace_stop"() : () -> ()
    %228 = tpu.concatenate %204, %227 in 2 : vector<2x8x16xf32>, vector<2x8x16xf32> -> vector<2x8x32xf32>
    %229 = vector.shape_cast %228 : vector<2x8x32xf32> to vector<16x32xf32>
    %c1_81 = arith.constant 1 : index
    %c0_82 = arith.constant 0 : index
    %c0_83 = arith.constant 0 : index
    %230 = vector.load %arg6[%c1_81, %c0_82, %c0_83] : memref<2x32x32xbf16, #tpu.memory_space<vmem>>, vector<1x32x32xbf16>
    %231 = vector.shape_cast %230 : vector<1x32x32xbf16> to vector<32x32xbf16>
    %232 = arith.truncf %229 : vector<16x32xf32> to vector<16x32xbf16>
    %cst_84 = arith.constant dense<0.000000e+00> : vector<16x32xf32>
    %233 = tpu.matmul %232, %231, %cst_84 {dimension_numbers = #tpu.dot_dimension_numbers<[1], [0], [0], [1], [0, 0, 1, 1], [], []>} : vector<16x32xbf16>, vector<32x32xbf16>, vector<16x32xf32> -> vector<16x32xf32>
    %234 = vector.broadcast %167 : vector<1x32xf32> to vector<16x32xf32>
    %235 = arith.addf %233, %234 : vector<16x32xf32>
    %236 = arith.addf %164, %235 : vector<16x32xf32>
    %cst_85 = arith.constant dense<0.000000e+00> : vector<16xf32>
    %237 = vector.multi_reduction <add>, %236, %cst_85 [1] : vector<16x32xf32> to vector<16xf32>
    %238 = vector.shape_cast %237 : vector<16xf32> to vector<16x1xf32>
    %cst_86 = arith.constant 3.200000e+01 : f32
    %239 = vector.broadcast %cst_86 : f32 to vector<16x1xf32>
    %240 = arith.divf %238, %239 : vector<16x1xf32>
    %241 = vector.broadcast %240 : vector<16x1xf32> to vector<16x32xf32>
    %242 = arith.subf %236, %241 : vector<16x32xf32>
    %243 = arith.mulf %242, %242 : vector<16x32xf32>
    %cst_87 = arith.constant dense<0.000000e+00> : vector<16xf32>
    %244 = vector.multi_reduction <add>, %243, %cst_87 [1] : vector<16x32xf32> to vector<16xf32>
    %245 = vector.shape_cast %244 : vector<16xf32> to vector<16x1xf32>
    %cst_88 = arith.constant 3.200000e+01 : f32
    %246 = vector.broadcast %cst_88 : f32 to vector<16x1xf32>
    %247 = arith.divf %245, %246 : vector<16x1xf32>
    %cst_89 = arith.constant 9.99999996E-13 : f32
    %248 = vector.broadcast %cst_89 : f32 to vector<16x1xf32>
    %249 = arith.addf %247, %248 : vector<16x1xf32>
    %250 = math.rsqrt %249 : vector<16x1xf32>
    %251 = vector.broadcast %250 : vector<16x1xf32> to vector<16x32xf32>
    %252 = arith.mulf %242, %251 : vector<16x32xf32>
    %253 = vector.broadcast %168 : vector<1x32xf32> to vector<16x32xf32>
    %254 = arith.mulf %252, %253 : vector<16x32xf32>
    %255 = vector.broadcast %169 : vector<1x32xf32> to vector<16x32xf32>
    %256 = arith.addf %254, %255 : vector<16x32xf32>
    %c1_90 = arith.constant 1 : index
    %c0_91 = arith.constant 0 : index
    %c0_92 = arith.constant 0 : index
    %257 = vector.load %arg8[%c1_90, %c0_91, %c0_92] : memref<2x32x64xbf16, #tpu.memory_space<vmem>>, vector<1x32x64xbf16>
    %258 = vector.shape_cast %257 : vector<1x32x64xbf16> to vector<32x64xbf16>
    %259 = arith.truncf %256 : vector<16x32xf32> to vector<16x32xbf16>
    %cst_93 = arith.constant dense<0.000000e+00> : vector<16x64xf32>
    %260 = tpu.matmul %259, %258, %cst_93 {dimension_numbers = #tpu.dot_dimension_numbers<[1], [0], [0], [1], [0, 0, 1, 1], [], []>} : vector<16x32xbf16>, vector<32x64xbf16>, vector<16x64xf32> -> vector<16x64xf32>
    %c1_94 = arith.constant 1 : index
    %c0_95 = arith.constant 0 : index
    %c0_96 = arith.constant 0 : index
    %261 = vector.load %arg9[%c1_94, %c0_95, %c0_96] : memref<2x1x64xf32, #tpu.memory_space<vmem>>, vector<1x1x64xf32>
    %262 = vector.shape_cast %261 : vector<1x1x64xf32> to vector<1x64xf32>
    %263 = vector.broadcast %262 : vector<1x64xf32> to vector<16x64xf32>
    %264 = arith.addf %260, %263 : vector<16x64xf32>
    %cst_97 = arith.constant 5.000000e-01 : f32
    %265 = vector.broadcast %cst_97 : f32 to vector<16x64xf32>
    %266 = arith.mulf %265, %264 : vector<16x64xf32>
    %cst_98 = arith.constant 4.471500e-02 : f32
    %267 = vector.broadcast %cst_98 : f32 to vector<16x64xf32>
    %268 = arith.mulf %267, %264 : vector<16x64xf32>
    %269 = arith.mulf %268, %264 : vector<16x64xf32>
    %270 = arith.mulf %269, %264 : vector<16x64xf32>
    %271 = arith.addf %264, %270 : vector<16x64xf32>
    %cst_99 = arith.constant 0.797884583 : f32
    %272 = vector.broadcast %cst_99 : f32 to vector<16x64xf32>
    %273 = arith.mulf %272, %271 : vector<16x64xf32>
    %274 = math.tanh %273 : vector<16x64xf32>
    %cst_100 = arith.constant 1.000000e+00 : f32
    %275 = vector.broadcast %cst_100 : f32 to vector<16x64xf32>
    %276 = arith.addf %275, %274 : vector<16x64xf32>
    %277 = arith.mulf %266, %276 : vector<16x64xf32>
    %c1_101 = arith.constant 1 : index
    %c0_102 = arith.constant 0 : index
    %c0_103 = arith.constant 0 : index
    %278 = vector.load %arg10[%c1_101, %c0_102, %c0_103] : memref<2x64x32xbf16, #tpu.memory_space<vmem>>, vector<1x64x32xbf16>
    %279 = vector.shape_cast %278 : vector<1x64x32xbf16> to vector<64x32xbf16>
    %280 = arith.truncf %277 : vector<16x64xf32> to vector<16x64xbf16>
    %cst_104 = arith.constant dense<0.000000e+00> : vector<16x32xf32>
    %281 = tpu.matmul %280, %279, %cst_104 {dimension_numbers = #tpu.dot_dimension_numbers<[1], [0], [0], [1], [0, 0, 1, 1], [], []>} : vector<16x64xbf16>, vector<64x32xbf16>, vector<16x32xf32> -> vector<16x32xf32>
    %282 = vector.broadcast %170 : vector<1x32xf32> to vector<16x32xf32>
    %283 = arith.addf %281, %282 : vector<16x32xf32>
    %284 = arith.addf %256, %283 : vector<16x32xf32>
    %cst_105 = arith.constant dense<0.000000e+00> : vector<16xf32>
    %285 = vector.multi_reduction <add>, %284, %cst_105 [1] : vector<16x32xf32> to vector<16xf32>
    %286 = vector.shape_cast %285 : vector<16xf32> to vector<16x1xf32>
    %cst_106 = arith.constant 3.200000e+01 : f32
    %287 = vector.broadcast %cst_106 : f32 to vector<16x1xf32>
    %288 = arith.divf %286, %287 : vector<16x1xf32>
    %289 = vector.broadcast %288 : vector<16x1xf32> to vector<16x32xf32>
    %290 = arith.subf %284, %289 : vector<16x32xf32>
    %291 = arith.mulf %290, %290 : vector<16x32xf32>
    %cst_107 = arith.constant dense<0.000000e+00> : vector<16xf32>
    %292 = vector.multi_reduction <add>, %291, %cst_107 [1] : vector<16x32xf32> to vector<16xf32>
    %293 = vector.shape_cast %292 : vector<16xf32> to vector<16x1xf32>
    %cst_108 = arith.constant 3.200000e+01 : f32
    %294 = vector.broadcast %cst_108 : f32 to vector<16x1xf32>
    %295 = arith.divf %293, %294 : vector<16x1xf32>
    %cst_109 = arith.constant 9.99999996E-13 : f32
    %296 = vector.broadcast %cst_109 : f32 to vector<16x1xf32>
    %297 = arith.addf %295, %296 : vector<16x1xf32>
    %298 = math.rsqrt %297 : vector<16x1xf32>
    %299 = vector.broadcast %298 : vector<16x1xf32> to vector<16x32xf32>
    %300 = arith.mulf %290, %299 : vector<16x32xf32>
    %301 = vector.broadcast %171 : vector<1x32xf32> to vector<16x32xf32>
    %302 = arith.mulf %300, %301 : vector<16x32xf32>
    %303 = vector.broadcast %172 : vector<1x32xf32> to vector<16x32xf32>
    %304 = arith.addf %302, %303 : vector<16x32xf32>
    %305 = vector.shape_cast %304 : vector<16x32xf32> to vector<2x8x32xf32>
    %306 = vector.extract_strided_slice %305 {offsets = [0, 0, 0], sizes = [2, 1, 32], strides = [1, 1, 1]} : vector<2x8x32xf32> to vector<2x1x32xf32>
    %307 = vector.shape_cast %306 : vector<2x1x32xf32> to vector<2x32xf32>
    %c0_110 = arith.constant 0 : index
    %c0_111 = arith.constant 0 : index
    %308 = vector.load %arg11[%c0_110, %c0_111] : memref<32x32xbf16, #tpu.memory_space<vmem>>, vector<32x32xbf16>
    %309 = arith.truncf %307 : vector<2x32xf32> to vector<2x32xbf16>
    %cst_112 = arith.constant dense<0.000000e+00> : vector<2x32xf32>
    %310 = tpu.matmul %309, %308, %cst_112 {dimension_numbers = #tpu.dot_dimension_numbers<[1], [0], [0], [1], [0, 0, 1, 1], [], []>} : vector<2x32xbf16>, vector<32x32xbf16>, vector<2x32xf32> -> vector<2x32xf32>
    %c0_113 = arith.constant 0 : index
    %c0_114 = arith.constant 0 : index
    %311 = vector.load %arg12[%c0_113, %c0_114] : memref<1x32xf32, #tpu.memory_space<vmem>>, vector<1x32xf32>
    %312 = vector.broadcast %311 : vector<1x32xf32> to vector<2x32xf32>
    %313 = arith.addf %310, %312 : vector<2x32xf32>
    %314 = math.tanh %313 : vector<2x32xf32>
    %c0_115 = arith.constant 0 : index
    %c0_116 = arith.constant 0 : index
    %315 = vector.load %arg13[%c0_115, %c0_116] : memref<32x128xbf16, #tpu.memory_space<vmem>>, vector<32x128xbf16>
    %316 = arith.truncf %314 : vector<2x32xf32> to vector<2x32xbf16>
    %cst_117 = arith.constant dense<0.000000e+00> : vector<2x128xf32>
    %317 = tpu.matmul %316, %315, %cst_117 {dimension_numbers = #tpu.dot_dimension_numbers<[1], [0], [0], [1], [0, 0, 1, 1], [], []>} : vector<2x32xbf16>, vector<32x128xbf16>, vector<2x128xf32> -> vector<2x128xf32>
    %c0_118 = arith.constant 0 : index
    %c0_119 = arith.constant 0 : index
    %318 = vector.load %arg14[%c0_118, %c0_119] : memref<1x128xf32, #tpu.memory_space<vmem>>, vector<1x128xf32>
    %319 = vector.broadcast %318 : vector<1x128xf32> to vector<2x128xf32>
    %320 = arith.addf %317, %319 : vector<2x128xf32>
    %c0_120 = arith.constant 0 : index
    %c0_121 = arith.constant 0 : index
    %321 = vector.load %arg15[%c0_120, %c0_121] : memref<2x128xf32, #tpu.memory_space<vmem>>, vector<2x128xf32>
    tpu.vector_store %arg15[%c0_120, %c0_121], %320 {strides = array<i32>} : memref<2x128xf32, #tpu.memory_space<vmem>>, vector<2x128xf32>,
    return
  }
  func.func @transform_0(%arg0: i32) -> (i32, i32, i32) {
    %c0_i32 = arith.constant 0 : i32
    %c0_i32_0 = arith.constant 0 : i32
    %c0_i32_1 = arith.constant 0 : i32
    return %arg0, %c0_i32, %c0_i32_0 : i32, i32, i32
  }
  func.func @transform_1(%arg0: i32) -> (i32, i32, i32) {
    %c0_i32 = arith.constant 0 : i32
    %c0_i32_0 = arith.constant 0 : i32
    %c0_i32_1 = arith.constant 0 : i32
    return %arg0, %c0_i32, %c0_i32_0 : i32, i32, i32
  }
  func.func @transform_2(%arg0: i32) -> (i32, i32) {
    %c0_i32 = arith.constant 0 : i32
    %c0_i32_0 = arith.constant 0 : i32
    %c0_i32_1 = arith.constant 0 : i32
    return %c0_i32, %c0_i32_0 : i32, i32
  }
  func.func @transform_3(%arg0: i32) -> (i32, i32, i32) {
    %c0_i32 = arith.constant 0 : i32
    %c0_i32_0 = arith.constant 0 : i32
    %c0_i32_1 = arith.constant 0 : i32
    %c0_i32_2 = arith.constant 0 : i32
    return %c0_i32, %c0_i32_0, %c0_i32_1 : i32, i32, i32
  }
  func.func @transform_4(%arg0: i32) -> (i32, i32, i32) {
    %c0_i32 = arith.constant 0 : i32
    %c0_i32_0 = arith.constant 0 : i32
    %c0_i32_1 = arith.constant 0 : i32
    %c0_i32_2 = arith.constant 0 : i32
    return %c0_i32, %c0_i32_0, %c0_i32_1 : i32, i32, i32
  }
  func.func @transform_5(%arg0: i32) -> (i32, i32, i32) {
    %c0_i32 = arith.constant 0 : i32
    %c0_i32_0 = arith.constant 0 : i32
    %c0_i32_1 = arith.constant 0 : i32
    %c0_i32_2 = arith.constant 0 : i32
    return %c0_i32, %c0_i32_0, %c0_i32_1 : i32, i32, i32
  }
  func.func @transform_6(%arg0: i32) -> (i32, i32, i32) {
    %c0_i32 = arith.constant 0 : i32
    %c0_i32_0 = arith.constant 0 : i32
    %c0_i32_1 = arith.constant 0 : i32
    %c0_i32_2 = arith.constant 0 : i32
    return %c0_i32, %c0_i32_0, %c0_i32_1 : i32, i32, i32
  }
  func.func @transform_7(%arg0: i32) -> (i32, i32, i32) {
    %c0_i32 = arith.constant 0 : i32
    %c0_i32_0 = arith.constant 0 : i32
    %c0_i32_1 = arith.constant 0 : i32
    %c0_i32_2 = arith.constant 0 : i32
    return %c0_i32, %c0_i32_0, %c0_i32_1 : i32, i32, i32
  }
  func.func @transform_8(%arg0: i32) -> (i32, i32, i32) {
    %c0_i32 = arith.constant 0 : i32
    %c0_i32_0 = arith.constant 0 : i32
    %c0_i32_1 = arith.constant 0 : i32
    %c0_i32_2 = arith.constant 0 : i32
    return %c0_i32, %c0_i32_0, %c0_i32_1 : i32, i32, i32
  }
  func.func @transform_9(%arg0: i32) -> (i32, i32, i32) {
    %c0_i32 = arith.constant 0 : i32
    %c0_i32_0 = arith.constant 0 : i32
    %c0_i32_1 = arith.constant 0 : i32
    %c0_i32_2 = arith.constant 0 : i32
    return %c0_i32, %c0_i32_0, %c0_i32_1 : i32, i32, i32
  }
  func.func @transform_10(%arg0: i32) -> (i32, i32) {
    %c0_i32 = arith.constant 0 : i32
    %c0_i32_0 = arith.constant 0 : i32
    %c0_i32_1 = arith.constant 0 : i32
    return %c0_i32, %c0_i32_0 : i32, i32
  }
  func.func @transform_11(%arg0: i32) -> (i32, i32) {
    %c0_i32 = arith.constant 0 : i32
    %c0_i32_0 = arith.constant 0 : i32
    %c0_i32_1 = arith.constant 0 : i32
    return %c0_i32, %c0_i32_0 : i32, i32
  }
  func.func @transform_12(%arg0: i32) -> (i32, i32) {
    %c0_i32 = arith.constant 0 : i32
    %c0_i32_0 = arith.constant 0 : i32
    %c0_i32_1 = arith.constant 0 : i32
    return %c0_i32, %c0_i32_0 : i32, i32
  }
  func.func @transform_13(%arg0: i32) -> (i32, i32) {
    %c0_i32 = arith.constant 0 : i32
    %c0_i32_0 = arith.constant 0 : i32
    %c0_i32_1 = arith.constant 0 : i32
    return %c0_i32, %c0_i32_0 : i32, i32
  }
  func.func @transform_14(%arg0: i32) -> (i32, i32) {
    %c0_i32 = arith.constant 0 : i32
    %c0_i32_0 = arith.constant 0 : i32
    return %arg0, %c0_i32 : i32, i32
  }
}

</mosaic_0001>

<llo_original>
// kernel: _lambda_.1
$region0: #{_lambda_.1}
  #allocation0 [shape = 'u32[]', space=smem, size = 0x4, offset = 0x4, fixed_abs, tag = 'smem constant byte address 0x4 - core index']
  #allocation1 [shape = 'u32[144,128]{1,0:T(1,128)}', space=vmem, size = 0x12000, scoped, tag = 'internal scratch']
  %s0 = inlined_call_operand.vmem [shape: f32[2,8,32], index: 0, kind: input, shape index: {}]
  %s1 = inlined_call_operand.vmem [shape: f32[2,1,8], index: 1, kind: input, shape index: {}]
  %s2 = inlined_call_operand.vmem [shape: f32[2,32], index: 2, kind: input, shape index: {}]
  %s3 = inlined_call_operand.vmem [shape: bf16[2,32,96], index: 3, kind: input, shape index: {}]
  %s4 = inlined_call_operand.vmem [shape: f32[2,1,96], index: 4, kind: input, shape index: {}]
  %s5 = inlined_call_operand.vmem [shape: bf16[2,32,32], index: 5, kind: input, shape index: {}]
  %s6 = inlined_call_operand.vmem [shape: f32[2,6,32], index: 6, kind: input, shape index: {}]
  %s7 = inlined_call_operand.vmem [shape: bf16[2,32,64], index: 7, kind: input, shape index: {}]
  %s8 = inlined_call_operand.vmem [shape: f32[2,1,64], index: 8, kind: input, shape index: {}]
  %s9 = inlined_call_operand.vmem [shape: bf16[2,64,32], index: 9, kind: input, shape index: {}]
  %s10 = inlined_call_operand.vmem [shape: bf16[32,32], index: 10, kind: input, shape index: {}]
  %s11 = inlined_call_operand.vmem [shape: f32[1,32], index: 11, kind: input, shape index: {}]
  %s12 = inlined_call_operand.vmem [shape: bf16[32,128], index: 12, kind: input, shape index: {}]
  %s13 = inlined_call_operand.vmem [shape: f32[1,128], index: 13, kind: input, shape index: {}]
  %s14 = inlined_call_operand.vmem [shape: f32[2,128], index: 14, kind: output, shape index: {}]
  %s15 = sld [smem:[#allocation0]]
  $region66: #{_lambda_.1} parent=0
    _
  %s17 = ssub.s32 1, %s15
  %s18 = scalar_select 0, %s17, %s15
  // Predicated region
  $region2: #{_lambda_.1} parent=0 // pred_check
    _
  $region3: #{_lambda_.1} parent=0 // pred_check_branch
    %20 = sbr.rel (0) target = $region5
  $region4: #{_lambda_.1} parent=0 // pred_region
    _
  $region5: #{_lambda_.1} parent=0 // pred_fallthru
    _
  // Predicated region
  $region6: #{_lambda_.1} parent=0 // pred_check
    _
  $region7: #{_lambda_.1} parent=0 // pred_check_branch
    %22 = sbr.rel (0) target = $region9
  $region8: #{_lambda_.1} parent=0 // pred_region
    _
  $region9: #{_lambda_.1} parent=0 // pred_fallthru
    _
  // Predicated region
  $region10: #{_lambda_.1} parent=0 // pred_check
    _
  $region11: #{_lambda_.1} parent=0 // pred_check_branch
    %24 = sbr.rel (0) target = $region13
  $region12: #{_lambda_.1} parent=0 // pred_region
    _
  $region13: #{_lambda_.1} parent=0 // pred_fallthru
    _
  // Predicated region
  $region14: #{_lambda_.1} parent=0 // pred_check
    _
  $region15: #{_lambda_.1} parent=0 // pred_check_branch
    %26 = sbr.rel (0) target = $region17
  $region16: #{_lambda_.1} parent=0 // pred_region
    _
  $region17: #{_lambda_.1} parent=0 // pred_fallthru
    _
  // Predicated region
  $region18: #{_lambda_.1} parent=0 // pred_check
    _
  $region19: #{_lambda_.1} parent=0 // pred_check_branch
    %28 = sbr.rel (0) target = $region21
  $region20: #{_lambda_.1} parent=0 // pred_region
    _
  $region21: #{_lambda_.1} parent=0 // pred_fallthru
    _
  // Predicated region
  $region22: #{_lambda_.1} parent=0 // pred_check
    _
  $region23: #{_lambda_.1} parent=0 // pred_check_branch
    %30 = sbr.rel (0) target = $region25
  $region24: #{_lambda_.1} parent=0 // pred_region
    _
  $region25: #{_lambda_.1} parent=0 // pred_fallthru
    _
  // Predicated region
  $region26: #{_lambda_.1} parent=0 // pred_check
    _
  $region27: #{_lambda_.1} parent=0 // pred_check_branch
    %32 = sbr.rel (0) target = $region29
  $region28: #{_lambda_.1} parent=0 // pred_region
    _
  $region29: #{_lambda_.1} parent=0 // pred_fallthru
    _
  // Predicated region
  $region30: #{_lambda_.1} parent=0 // pred_check
    _
  $region31: #{_lambda_.1} parent=0 // pred_check_branch
    %34 = sbr.rel (0) target = $region33
  $region32: #{_lambda_.1} parent=0 // pred_region
    _
  $region33: #{_lambda_.1} parent=0 // pred_fallthru
    _
  // Predicated region
  $region34: #{_lambda_.1} parent=0 // pred_check
    _
  $region35: #{_lambda_.1} parent=0 // pred_check_branch
    %36 = sbr.rel (0) target = $region37
  $region36: #{_lambda_.1} parent=0 // pred_region
    _
  $region37: #{_lambda_.1} parent=0 // pred_fallthru
    _
  // Predicated region
  $region38: #{_lambda_.1} parent=0 // pred_check
    _
  $region39: #{_lambda_.1} parent=0 // pred_check_branch
    %38 = sbr.rel (0) target = $region41
  $region40: #{_lambda_.1} parent=0 // pred_region
    _
  $region41: #{_lambda_.1} parent=0 // pred_fallthru
    _
  // Predicated region
  $region42: #{_lambda_.1} parent=0 // pred_check
    _
  $region43: #{_lambda_.1} parent=0 // pred_check_branch
    %40 = sbr.rel (0) target = $region45
  $region44: #{_lambda_.1} parent=0 // pred_region
    _
  $region45: #{_lambda_.1} parent=0 // pred_fallthru
    _
  // Predicated region
  $region46: #{_lambda_.1} parent=0 // pred_check
    _
  $region47: #{_lambda_.1} parent=0 // pred_check_branch
    %42 = sbr.rel (0) target = $region49
  $region48: #{_lambda_.1} parent=0 // pred_region
    _
  $region49: #{_lambda_.1} parent=0 // pred_fallthru
    _
  // Predicated region
  $region50: #{_lambda_.1} parent=0 // pred_check
    _
  $region51: #{_lambda_.1} parent=0 // pred_check_branch
    %44 = sbr.rel (0) target = $region53
  $region52: #{_lambda_.1} parent=0 // pred_region
    _
  $region53: #{_lambda_.1} parent=0 // pred_fallthru
    _
  // Predicated region
  $region54: #{_lambda_.1} parent=0 // pred_check
    _
  $region55: #{_lambda_.1} parent=0 // pred_check_branch
    %46 = sbr.rel (0) target = $region57
  $region56: #{_lambda_.1} parent=0 // pred_region
    _
  $region57: #{_lambda_.1} parent=0 // pred_fallthru
    _
  %v48 = vld [vmem:[%s0] sm:$0xff]
  %v49 = vld [vmem:[%s0 + $0x8] sm:$0xff]
  %v50 = vld [vmem:[%s1] sm:$0x1]
  %v51 = vld [vmem:[%s1 + $0x1] sm:$0x1]
  %v52 = vld [vmem:[%s2] sm:$0x1]
  %v53 = vld [vmem:[%s2 + $0x1] sm:$0x1]
  %vm54 = vcmask 261120
  %v55 = vsel %vm54, %v48, 0.0
  %56 = vadd.xlane.f32.xlu0 %v55
  %v57 = vpop.xlane.xlu0 %56
  %v58 = vsel %vm54, %v49, 0.0
  %59 = vadd.xlane.f32.xlu0 %v58
  %v60 = vpop.xlane.xlu0 %59
  %v61 = vrcp.pop 32.0
  %v62 = vmul.f32 %v57, %v61
  %v63 = vmul.f32 %v60, %v61
  %v64 = vsub.f32 %v48, %v62
  %v65 = vsub.f32 %v49, %v63
  %v66 = vmul.f32 %v64, %v64
  %v67 = vmul.f32 %v65, %v65
  %v68 = vsel %vm54, %v66, 0.0
  %69 = vadd.xlane.f32.xlu0 %v68
  %v70 = vpop.xlane.xlu0 %69
  %v71 = vsel %vm54, %v67, 0.0
  %72 = vadd.xlane.f32.xlu0 %v71
  %v73 = vpop.xlane.xlu0 %72
  %v74 = vmul.f32 %v70, %v61
  %v75 = vmul.f32 %v73, %v61
  %v76 = vadd.f32 %v74, 1e-12
  %v77 = vadd.f32 %v75, 1e-12
  %v78 = vrsqrt.pop %v76
  %v79 = vrsqrt.pop %v77
  %v80 = vmul.f32 %v64, %v78
  %v81 = vmul.f32 %v65, %v79
  %v82 = vlaneseq
  %v83 = vshrl.u32 %v82, 7
  %v84 = vsub.s32 0, %v83
  %v85 = vrot.slane %v52, %v84
  %v86 = vmul.f32 %v80, %v85
  %v87 = vmul.f32 %v81, %v85
  %v88 = vlaneseq
  %v89 = vshrl.u32 %v88, 7
  %v90 = vsub.s32 0, %v89
  %v91 = vrot.slane %v53, %v90
  %v92 = vadd.f32 %v86, %v91
  %v93 = vadd.f32 %v87, %v91
  %v94 = vld [vmem:[%s6] sm:$0x3f]
  %v95 = vld [vmem:[%s3] sm:$0xf]
  %v96 = vld [vmem:[%s3 + $0x4] sm:$0xf]
  %v97 = vld [vmem:[%s3 + $0x8] sm:$0xf]
  %v98 = vld [vmem:[%s3 + $0xc] sm:$0xf]
  %v99 = vpack.c.bf16 %v93, %v92
  %v100 = vld [vmem:[%s4] sm:$0x1]
  %v102 = vlaneseq
  %v103 = vshrl.u32 %v102, 7
  %v104 = vsub.s32 0, %v103
  %v105 = vrot.slane %v100, %v104
  %v111 = vunpack.c.l.b16 %v95
  %v112 = vunpack.c.l.b16 %v96
  %v113 = vunpack.c.l.b16 %v97
  %v114 = vunpack.c.l.b16 %v98
  %v115 = vpack.c.b16 %v112, %v111
  %v116 = vpack.c.b16 %v114, %v113
  %v120 = vsel %vm54, %v99, 0
  %122 = vmatprep.subr.bf16.mxu0 0
  %123 = vmatpush1.bf16.msra.mxu0 %v115
  %124 = vmatprep.subr.bf16.mxu0 0
  %125 = vmatpush1.bf16.msra.mxu0 %v116
  %126 = vmatprep.subr.bf16.mxu0 0
  %127 = vmatpush1.bf16.msra.mxu0 0
  %128 = vmatprep.subr.bf16.mxu0 0
  %129 = vmatpush1.bf16.msra.mxu0 0
  %130 = vmatprep.subr.bf16.mxu0 0
  %131 = vmatpush1.bf16.msra.mxu0 0
  %132 = vmatprep.subr.bf16.mxu0 0
  %133 = vmatpush1.bf16.msra.mxu0 0
  %134 = vmatprep.subr.bf16.mxu0 0
  %135 = vmatpush1.bf16.msra.mxu0 0
  %136 = vmatprep.subr.bf16.mxu0 0
  %137 = vmatpush1.bf16.msra.mxu0 0
  %138 = vmatprep.subr.bf16.mxu0 0
  %139 = vmatpush1.bf16.msra.mxu0 0
  %140 = vmatprep.subr.bf16.mxu0 0
  %141 = vmatpush1.bf16.msra.mxu0 0
  %142 = vmatprep.subr.bf16.mxu0 0
  %143 = vmatpush1.bf16.msra.mxu0 0
  %144 = vmatprep.subr.bf16.mxu0 0
  %145 = vmatpush1.bf16.msra.mxu0 0
  %146 = vmatprep.subr.bf16.mxu0 0
  %147 = vmatpush1.bf16.msra.mxu0 0
  %148 = vmatprep.subr.bf16.mxu0 0
  %149 = vmatpush1.bf16.msra.mxu0 0
  %150 = vmatprep.subr.bf16.mxu0 0
  %151 = vmatpush1.bf16.msra.mxu0 0
  %152 = vmatprep.subr.bf16.mxu0 0
  %153 = vmatpush1.bf16.msra.mxu0 0
  %154 = vmatprep.mubr.bf16.mxu0 0
  %155 = vmatmul.mubr.bf16.gmra.mrb[0].mxu0 %v120
  %v156 = vpop.f32.mrb[0].mxu0
  %v157 = vadd.f32 %v105, %v156
  %v158 = vpop.f32.mrb[0].mxu0
  %v159 = vpop.f32.mrb[0].mxu0
  %v160 = vadd.f32 %v105, %v159
  %v161 = vpop.f32.mrb[0].mxu0
  %162 = vdwg.mxu0
  %v163 = vpack.c.bf16 %v157, %v157
  %v164 = vpack.c.bf16 %v160, %v160
  %166 = vrot.lane.b32.xlu0 %v163, 96
  %v167 = vpop.permute.xlu0 %166
  %vm168 = vcmask 130048
  %v170 = vsel %vm168, %v163, 0
  %v173 = vsel %vm168, %v167, 0
  %175 = vmatprep.subr.bf16.mxu0 0
  %176 = vmatpush1.bf16.xpose.msra.mxu0 %v173
  %177 = vmatprep.subr.bf16.mxu0 0
  %178 = vmatpush1.bf16.xpose.msra.mxu0 0
  %179 = vmatprep.subr.bf16.mxu0 0
  %180 = vmatpush1.bf16.xpose.msra.mxu0 0
  %181 = vmatprep.subr.bf16.mxu0 0
  %182 = vmatpush1.bf16.xpose.msra.mxu0 0
  %183 = vmatprep.subr.bf16.mxu0 0
  %184 = vmatpush1.bf16.xpose.msra.mxu0 0
  %185 = vmatprep.subr.bf16.mxu0 0
  %186 = vmatpush1.bf16.xpose.msra.mxu0 0
  %187 = vmatprep.subr.bf16.mxu0 0
  %188 = vmatpush1.bf16.xpose.msra.mxu0 0
  %189 = vmatprep.subr.bf16.mxu0 0
  %190 = vmatpush1.bf16.xpose.msra.mxu0 0
  %191 = vmatprep.subr.bf16.mxu0 0
  %192 = vmatpush1.bf16.xpose.msra.mxu0 0
  %193 = vmatprep.subr.bf16.mxu0 0
  %194 = vmatpush1.bf16.xpose.msra.mxu0 0
  %195 = vmatprep.subr.bf16.mxu0 0
  %196 = vmatpush1.bf16.xpose.msra.mxu0 0
  %197 = vmatprep.subr.bf16.mxu0 0
  %198 = vmatpush1.bf16.xpose.msra.mxu0 0
  %199 = vmatprep.subr.bf16.mxu0 0
  %200 = vmatpush1.bf16.xpose.msra.mxu0 0
  %201 = vmatprep.subr.bf16.mxu0 0
  %202 = vmatpush1.bf16.xpose.msra.mxu0 0
  %203 = vmatprep.subr.bf16.mxu0 0
  %204 = vmatpush1.bf16.xpose.msra.mxu0 0
  %205 = vmatprep.subr.bf16.mxu0 0
  %206 = vmatpush1.bf16.xpose.msra.mxu0 0
  %207 = vmatprep.mubr.bf16.mxu0 0
  %208 = vmatmul.mubr.bf16.gmra.mrb[0].mxu0 %v170
  %v209 = vpop.f32.mrb[0].mxu0
  %v210 = vadd.f32 0.0, %v209
  %v211 = vpop.f32.mrb[0].mxu0
  %v212 = vpop.f32.mrb[0].mxu0
  %v213 = vpop.f32.mrb[0].mxu0
  %214 = vdwg.mxu0
  %216 = vrot.lane.b32.xlu0 %v164, 96
  %v217 = vpop.permute.xlu0 %216
  %v219 = vsel %vm168, %v164, 0
  %v222 = vsel %vm168, %v217, 0
  %224 = vmatprep.subr.bf16.mxu0 0
  %225 = vmatpush1.bf16.xpose.msra.mxu0 %v222
  %226 = vmatprep.subr.bf16.mxu0 0
  %227 = vmatpush1.bf16.xpose.msra.mxu0 0
  %228 = vmatprep.subr.bf16.mxu0 0
  %229 = vmatpush1.bf16.xpose.msra.mxu0 0
  %230 = vmatprep.subr.bf16.mxu0 0
  %231 = vmatpush1.bf16.xpose.msra.mxu0 0
  %232 = vmatprep.subr.bf16.mxu0 0
  %233 = vmatpush1.bf16.xpose.msra.mxu0 0
  %234 = vmatprep.subr.bf16.mxu0 0
  %235 = vmatpush1.bf16.xpose.msra.mxu0 0
  %236 = vmatprep.subr.bf16.mxu0 0
  %237 = vmatpush1.bf16.xpose.msra.mxu0 0
  %238 = vmatprep.subr.bf16.mxu0 0
  %239 = vmatpush1.bf16.xpose.msra.mxu0 0
  %240 = vmatprep.subr.bf16.mxu0 0
  %241 = vmatpush1.bf16.xpose.msra.mxu0 0
  %242 = vmatprep.subr.bf16.mxu0 0
  %243 = vmatpush1.bf16.xpose.msra.mxu0 0
  %244 = vmatprep.subr.bf16.mxu0 0
  %245 = vmatpush1.bf16.xpose.msra.mxu0 0
  %246 = vmatprep.subr.bf16.mxu0 0
  %247 = vmatpush1.bf16.xpose.msra.mxu0 0
  %248 = vmatprep.subr.bf16.mxu0 0
  %249 = vmatpush1.bf16.xpose.msra.mxu0 0
  %250 = vmatprep.subr.bf16.mxu0 0
  %251 = vmatpush1.bf16.xpose.msra.mxu0 0
  %252 = vmatprep.subr.bf16.mxu0 0
  %253 = vmatpush1.bf16.xpose.msra.mxu0 0
  %254 = vmatprep.subr.bf16.mxu0 0
  %255 = vmatpush1.bf16.xpose.msra.mxu0 0
  %256 = vmatprep.mubr.bf16.mxu0 0
  %257 = vmatmul.mubr.bf16.gmra.mrb[0].mxu0 %v219
  %v258 = vpop.f32.mrb[0].mxu0
  %v259 = vadd.f32 0.0, %v258
  %v260 = vpop.f32.mrb[0].mxu0
  %v261 = vpop.f32.mrb[0].mxu0
  %v262 = vpop.f32.mrb[0].mxu0
  %263 = vdwg.mxu0
  %v264 = vmul.f32 %v210, 0.25
  %v265 = vmul.f32 %v259, 0.25
  %v268 = vlaneseq
  %v269 = vshrl.u32 %v268, 7
  %v270 = vsub.s32 0, %v269
  %v271 = vrot.slane %v50, %v270
  %v272 = vlaneseq
  %v273 = vshrl.u32 %v272, 7
  %v274 = vsub.s32 0, %v273
  %v275 = vrot.slane %v51, %v274
  %v278 = vadd.f32 %v264, %v271
  %v279 = vadd.f32 %v265, %v275
  %vm280 = vcmask 64512
  %v281 = vsel %vm280, %v278, -inf
  %282 = vmax.xlane.f32.xlu0 %v281
  %v283 = vpop.xlane.xlu0 %282
  %v284 = vsel %vm280, %v279, -inf
  %285 = vmax.xlane.f32.xlu0 %v284
  %v286 = vpop.xlane.xlu0 %285
  %v287 = vsub.f32 %v278, %v283
  %v288 = vsub.f32 %v279, %v286
  %v289 = vmul.f32 %v287, 1.442695
  %v290 = vpow.pop %v289
  %v291 = vmul.f32 %v288, 1.442695
  %v292 = vpow.pop %v291
  %v293 = vsel %vm280, %v290, 0.0
  %294 = vadd.xlane.f32.xlu0 %v293
  %v295 = vpop.xlane.xlu0 %294
  %v296 = vsel %vm280, %v292, 0.0
  %297 = vadd.xlane.f32.xlu0 %v296
  %v298 = vpop.xlane.xlu0 %297
  %v299 = vrcp.pop %v295
  %v300 = vrcp.pop %v298
  %v301 = vmul.f32 %v290, %v299
  %v302 = vmul.f32 %v292, %v300
  %v303 = vpack.c.bf16 %v301, %v301
  %v304 = vpack.c.bf16 %v302, %v302
  %305 = vrot.lane.b32.xlu0 %v163, 64
  %v306 = vpop.permute.xlu0 %305
  %v308 = vsel %vm280, %v303, 0
  %vm310 = vcmask 1043456
  %v312 = vsel %vm310, %v306, 0
  %314 = vmatprep.subr.bf16.mxu0 0
  %315 = vmatpush1.bf16.msra.mxu0 %v312
  %316 = vmatprep.subr.bf16.mxu0 0
  %317 = vmatpush1.bf16.msra.mxu0 0
  %318 = vmatprep.subr.bf16.mxu0 0
  %319 = vmatpush1.bf16.msra.mxu0 0
  %320 = vmatprep.subr.bf16.mxu0 0
  %321 = vmatpush1.bf16.msra.mxu0 0
  %322 = vmatprep.subr.bf16.mxu0 0
  %323 = vmatpush1.bf16.msra.mxu0 0
  %324 = vmatprep.subr.bf16.mxu0 0
  %325 = vmatpush1.bf16.msra.mxu0 0
  %326 = vmatprep.subr.bf16.mxu0 0
  %327 = vmatpush1.bf16.msra.mxu0 0
  %328 = vmatprep.subr.bf16.mxu0 0
  %329 = vmatpush1.bf16.msra.mxu0 0
  %330 = vmatprep.subr.bf16.mxu0 0
  %331 = vmatpush1.bf16.msra.mxu0 0
  %332 = vmatprep.subr.bf16.mxu0 0
  %333 = vmatpush1.bf16.msra.mxu0 0
  %334 = vmatprep.subr.bf16.mxu0 0
  %335 = vmatpush1.bf16.msra.mxu0 0
  %336 = vmatprep.subr.bf16.mxu0 0
  %337 = vmatpush1.bf16.msra.mxu0 0
  %338 = vmatprep.subr.bf16.mxu0 0
  %339 = vmatpush1.bf16.msra.mxu0 0
  %340 = vmatprep.subr.bf16.mxu0 0
  %341 = vmatpush1.bf16.msra.mxu0 0
  %342 = vmatprep.subr.bf16.mxu0 0
  %343 = vmatpush1.bf16.msra.mxu0 0
  %344 = vmatprep.subr.bf16.mxu0 0
  %345 = vmatpush1.bf16.msra.mxu0 0
  %346 = vmatprep.mubr.bf16.mxu0 0
  %347 = vmatmul.mubr.bf16.gmra.mrb[0].mxu0 %v308
  %v348 = vpop.f32.mrb[0].mxu0
  %v349 = vadd.f32 0.0, %v348
  %v350 = vpop.f32.mrb[0].mxu0
  %v351 = vpop.f32.mrb[0].mxu0
  %v352 = vpop.f32.mrb[0].mxu0
  %353 = vdwg.mxu0
  %354 = vrot.lane.b32.xlu0 %v164, 64
  %v355 = vpop.permute.xlu0 %354
  %v357 = vsel %vm280, %v304, 0
  %v360 = vsel %vm310, %v355, 0
  %362 = vmatprep.subr.bf16.mxu0 0
  %363 = vmatpush1.bf16.msra.mxu0 %v360
  %364 = vmatprep.subr.bf16.mxu0 0
  %365 = vmatpush1.bf16.msra.mxu0 0
  %366 = vmatprep.subr.bf16.mxu0 0
  %367 = vmatpush1.bf16.msra.mxu0 0
  %368 = vmatprep.subr.bf16.mxu0 0
  %369 = vmatpush1.bf16.msra.mxu0 0
  %370 = vmatprep.subr.bf16.mxu0 0
  %371 = vmatpush1.bf16.msra.mxu0 0
  %372 = vmatprep.subr.bf16.mxu0 0
  %373 = vmatpush1.bf16.msra.mxu0 0
  %374 = vmatprep.subr.bf16.mxu0 0
  %375 = vmatpush1.bf16.msra.mxu0 0
  %376 = vmatprep.subr.bf16.mxu0 0
  %377 = vmatpush1.bf16.msra.mxu0 0
  %378 = vmatprep.subr.bf16.mxu0 0
  %379 = vmatpush1.bf16.msra.mxu0 0
  %380 = vmatprep.subr.bf16.mxu0 0
  %381 = vmatpush1.bf16.msra.mxu0 0
  %382 = vmatprep.subr.bf16.mxu0 0
  %383 = vmatpush1.bf16.msra.mxu0 0
  %384 = vmatprep.subr.bf16.mxu0 0
  %385 = vmatpush1.bf16.msra.mxu0 0
  %386 = vmatprep.subr.bf16.mxu0 0
  %387 = vmatpush1.bf16.msra.mxu0 0
  %388 = vmatprep.subr.bf16.mxu0 0
  %389 = vmatpush1.bf16.msra.mxu0 0
  %390 = vmatprep.subr.bf16.mxu0 0
  %391 = vmatpush1.bf16.msra.mxu0 0
  %392 = vmatprep.subr.bf16.mxu0 0
  %393 = vmatpush1.bf16.msra.mxu0 0
  %394 = vmatprep.mubr.bf16.mxu0 0
  %395 = vmatmul.mubr.bf16.gmra.mrb[0].mxu0 %v357
  %v396 = vpop.f32.mrb[0].mxu0
  %v397 = vadd.f32 0.0, %v396
  %v398 = vpop.f32.mrb[0].mxu0
  %v399 = vpop.f32.mrb[0].mxu0
  %v400 = vpop.f32.mrb[0].mxu0
  %401 = vdwg.mxu0
  %402 = vrot.lane.b32.xlu0 %v163, 112
  %v403 = vpop.permute.xlu0 %402
  %404 = vrot.lane.b32.xlu0 %v163, 80
  %v405 = vpop.permute.xlu0 %404
  %v407 = vsel %vm168, %v403, 0
  %v410 = vsel %vm168, %v405, 0
  %412 = vmatprep.subr.bf16.mxu0 0
  %413 = vmatpush1.bf16.xpose.msra.mxu0 %v410
  %414 = vmatprep.subr.bf16.mxu0 0
  %415 = vmatpush1.bf16.xpose.msra.mxu0 0
  %416 = vmatprep.subr.bf16.mxu0 0
  %417 = vmatpush1.bf16.xpose.msra.mxu0 0
  %418 = vmatprep.subr.bf16.mxu0 0
  %419 = vmatpush1.bf16.xpose.msra.mxu0 0
  %420 = vmatprep.subr.bf16.mxu0 0
  %421 = vmatpush1.bf16.xpose.msra.mxu0 0
  %422 = vmatprep.subr.bf16.mxu0 0
  %423 = vmatpush1.bf16.xpose.msra.mxu0 0
  %424 = vmatprep.subr.bf16.mxu0 0
  %425 = vmatpush1.bf16.xpose.msra.mxu0 0
  %426 = vmatprep.subr.bf16.mxu0 0
  %427 = vmatpush1.bf16.xpose.msra.mxu0 0
  %428 = vmatprep.subr.bf16.mxu0 0
  %429 = vmatpush1.bf16.xpose.msra.mxu0 0
  %430 = vmatprep.subr.bf16.mxu0 0
  %431 = vmatpush1.bf16.xpose.msra.mxu0 0
  %432 = vmatprep.subr.bf16.mxu0 0
  %433 = vmatpush1.bf16.xpose.msra.mxu0 0
  %434 = vmatprep.subr.bf16.mxu0 0
  %435 = vmatpush1.bf16.xpose.msra.mxu0 0
  %436 = vmatprep.subr.bf16.mxu0 0
  %437 = vmatpush1.bf16.xpose.msra.mxu0 0
  %438 = vmatprep.subr.bf16.mxu0 0
  %439 = vmatpush1.bf16.xpose.msra.mxu0 0
  %440 = vmatprep.subr.bf16.mxu0 0
  %441 = vmatpush1.bf16.xpose.msra.mxu0 0
  %442 = vmatprep.subr.bf16.mxu0 0
  %443 = vmatpush1.bf16.xpose.msra.mxu0 0
  %444 = vmatprep.mubr.bf16.mxu0 0
  %445 = vmatmul.mubr.bf16.gmra.mrb[0].mxu0 %v407
  %v446 = vpop.f32.mrb[0].mxu0
  %v447 = vadd.f32 0.0, %v446
  %v448 = vpop.f32.mrb[0].mxu0
  %v449 = vpop.f32.mrb[0].mxu0
  %v450 = vpop.f32.mrb[0].mxu0
  %451 = vdwg.mxu0
  %452 = vrot.lane.b32.xlu0 %v164, 112
  %v453 = vpop.permute.xlu0 %452
  %454 = vrot.lane.b32.xlu0 %v164, 80
  %v455 = vpop.permute.xlu0 %454
  %v457 = vsel %vm168, %v453, 0
  %v460 = vsel %vm168, %v455, 0
  %462 = vmatprep.subr.bf16.mxu0 0
  %463 = vmatpush1.bf16.xpose.msra.mxu0 %v460
  %464 = vmatprep.subr.bf16.mxu0 0
  %465 = vmatpush1.bf16.xpose.msra.mxu0 0
  %466 = vmatprep.subr.bf16.mxu0 0
  %467 = vmatpush1.bf16.xpose.msra.mxu0 0
  %468 = vmatprep.subr.bf16.mxu0 0
  %469 = vmatpush1.bf16.xpose.msra.mxu0 0
  %470 = vmatprep.subr.bf16.mxu0 0
  %471 = vmatpush1.bf16.xpose.msra.mxu0 0
  %472 = vmatprep.subr.bf16.mxu0 0
  %473 = vmatpush1.bf16.xpose.msra.mxu0 0
  %474 = vmatprep.subr.bf16.mxu0 0
  %475 = vmatpush1.bf16.xpose.msra.mxu0 0
  %476 = vmatprep.subr.bf16.mxu0 0
  %477 = vmatpush1.bf16.xpose.msra.mxu0 0
  %478 = vmatprep.subr.bf16.mxu0 0
  %479 = vmatpush1.bf16.xpose.msra.mxu0 0
  %480 = vmatprep.subr.bf16.mxu0 0
  %481 = vmatpush1.bf16.xpose.msra.mxu0 0
  %482 = vmatprep.subr.bf16.mxu0 0
  %483 = vmatpush1.bf16.xpose.msra.mxu0 0
  %484 = vmatprep.subr.bf16.mxu0 0
  %485 = vmatpush1.bf16.xpose.msra.mxu0 0
  %486 = vmatprep.subr.bf16.mxu0 0
  %487 = vmatpush1.bf16.xpose.msra.mxu0 0
  %488 = vmatprep.subr.bf16.mxu0 0
  %489 = vmatpush1.bf16.xpose.msra.mxu0 0
  %490 = vmatprep.subr.bf16.mxu0 0
  %491 = vmatpush1.bf16.xpose.msra.mxu0 0
  %492 = vmatprep.subr.bf16.mxu0 0
  %493 = vmatpush1.bf16.xpose.msra.mxu0 0
  %494 = vmatprep.mubr.bf16.mxu0 0
  %495 = vmatmul.mubr.bf16.gmra.mrb[0].mxu0 %v457
  %v496 = vpop.f32.mrb[0].mxu0
  %v497 = vadd.f32 0.0, %v496
  %v498 = vpop.f32.mrb[0].mxu0
  %v499 = vpop.f32.mrb[0].mxu0
  %v500 = vpop.f32.mrb[0].mxu0
  %501 = vdwg.mxu0
  %v502 = vmul.f32 %v447, 0.25
  %v503 = vmul.f32 %v497, 0.25
  %v504 = vadd.f32 %v502, %v271
  %v505 = vadd.f32 %v503, %v275
  %v506 = vsel %vm280, %v504, -inf
  %507 = vmax.xlane.f32.xlu0 %v506
  %v508 = vpop.xlane.xlu0 %507
  %v509 = vsel %vm280, %v505, -inf
  %510 = vmax.xlane.f32.xlu0 %v509
  %v511 = vpop.xlane.xlu0 %510
  %v512 = vsub.f32 %v504, %v508
  %v513 = vsub.f32 %v505, %v511
  %v514 = vmul.f32 %v512, 1.442695
  %v515 = vpow.pop %v514
  %v516 = vmul.f32 %v513, 1.442695
  %v517 = vpow.pop %v516
  %v518 = vsel %vm280, %v515, 0.0
  %519 = vadd.xlane.f32.xlu0 %v518
  %v520 = vpop.xlane.xlu0 %519
  %v521 = vsel %vm280, %v517, 0.0
  %522 = vadd.xlane.f32.xlu0 %v521
  %v523 = vpop.xlane.xlu0 %522
  %v524 = vrcp.pop %v520
  %v525 = vrcp.pop %v523
  %v526 = vmul.f32 %v515, %v524
  %v527 = vmul.f32 %v517, %v525
  %v528 = vpack.c.bf16 %v526, %v526
  %v529 = vpack.c.bf16 %v527, %v527
  %530 = vrot.lane.b32.xlu0 %v163, 48
  %v531 = vpop.permute.xlu0 %530
  %v533 = vsel %vm280, %v528, 0
  %v536 = vsel %vm310, %v531, 0
  %538 = vmatprep.subr.bf16.mxu0 0
  %539 = vmatpush1.bf16.msra.mxu0 %v536
  %540 = vmatprep.subr.bf16.mxu0 0
  %541 = vmatpush1.bf16.msra.mxu0 0
  %542 = vmatprep.subr.bf16.mxu0 0
  %543 = vmatpush1.bf16.msra.mxu0 0
  %544 = vmatprep.subr.bf16.mxu0 0
  %545 = vmatpush1.bf16.msra.mxu0 0
  %546 = vmatprep.subr.bf16.mxu0 0
  %547 = vmatpush1.bf16.msra.mxu0 0
  %548 = vmatprep.subr.bf16.mxu0 0
  %549 = vmatpush1.bf16.msra.mxu0 0
  %550 = vmatprep.subr.bf16.mxu0 0
  %551 = vmatpush1.bf16.msra.mxu0 0
  %552 = vmatprep.subr.bf16.mxu0 0
  %553 = vmatpush1.bf16.msra.mxu0 0
  %554 = vmatprep.subr.bf16.mxu0 0
  %555 = vmatpush1.bf16.msra.mxu0 0
  %556 = vmatprep.subr.bf16.mxu0 0
  %557 = vmatpush1.bf16.msra.mxu0 0
  %558 = vmatprep.subr.bf16.mxu0 0
  %559 = vmatpush1.bf16.msra.mxu0 0
  %560 = vmatprep.subr.bf16.mxu0 0
  %561 = vmatpush1.bf16.msra.mxu0 0
  %562 = vmatprep.subr.bf16.mxu0 0
  %563 = vmatpush1.bf16.msra.mxu0 0
  %564 = vmatprep.subr.bf16.mxu0 0
  %565 = vmatpush1.bf16.msra.mxu0 0
  %566 = vmatprep.subr.bf16.mxu0 0
  %567 = vmatpush1.bf16.msra.mxu0 0
  %568 = vmatprep.subr.bf16.mxu0 0
  %569 = vmatpush1.bf16.msra.mxu0 0
  %570 = vmatprep.mubr.bf16.mxu0 0
  %571 = vmatmul.mubr.bf16.gmra.mrb[0].mxu0 %v533
  %v572 = vpop.f32.mrb[0].mxu0
  %v573 = vadd.f32 0.0, %v572
  %v574 = vpop.f32.mrb[0].mxu0
  %v575 = vpop.f32.mrb[0].mxu0
  %v576 = vpop.f32.mrb[0].mxu0
  %577 = vdwg.mxu0
  %578 = vrot.lane.b32.xlu0 %v164, 48
  %v579 = vpop.permute.xlu0 %578
  %v581 = vsel %vm280, %v529, 0
  %v584 = vsel %vm310, %v579, 0
  %586 = vmatprep.subr.bf16.mxu0 0
  %587 = vmatpush1.bf16.msra.mxu0 %v584
  %588 = vmatprep.subr.bf16.mxu0 0
  %589 = vmatpush1.bf16.msra.mxu0 0
  %590 = vmatprep.subr.bf16.mxu0 0
  %591 = vmatpush1.bf16.msra.mxu0 0
  %592 = vmatprep.subr.bf16.mxu0 0
  %593 = vmatpush1.bf16.msra.mxu0 0
  %594 = vmatprep.subr.bf16.mxu0 0
  %595 = vmatpush1.bf16.msra.mxu0 0
  %596 = vmatprep.subr.bf16.mxu0 0
  %597 = vmatpush1.bf16.msra.mxu0 0
  %598 = vmatprep.subr.bf16.mxu0 0
  %599 = vmatpush1.bf16.msra.mxu0 0
  %600 = vmatprep.subr.bf16.mxu0 0
  %601 = vmatpush1.bf16.msra.mxu0 0
  %602 = vmatprep.subr.bf16.mxu0 0
  %603 = vmatpush1.bf16.msra.mxu0 0
  %604 = vmatprep.subr.bf16.mxu0 0
  %605 = vmatpush1.bf16.msra.mxu0 0
  %606 = vmatprep.subr.bf16.mxu0 0
  %607 = vmatpush1.bf16.msra.mxu0 0
  %608 = vmatprep.subr.bf16.mxu0 0
  %609 = vmatpush1.bf16.msra.mxu0 0
  %610 = vmatprep.subr.bf16.mxu0 0
  %611 = vmatpush1.bf16.msra.mxu0 0
  %612 = vmatprep.subr.bf16.mxu0 0
  %613 = vmatpush1.bf16.msra.mxu0 0
  %614 = vmatprep.subr.bf16.mxu0 0
  %615 = vmatpush1.bf16.msra.mxu0 0
  %616 = vmatprep.subr.bf16.mxu0 0
  %617 = vmatpush1.bf16.msra.mxu0 0
  %618 = vmatprep.mubr.bf16.mxu0 0
  %619 = vmatmul.mubr.bf16.gmra.mrb[0].mxu0 %v581
  %v620 = vpop.f32.mrb[0].mxu0
  %v621 = vadd.f32 0.0, %v620
  %v622 = vpop.f32.mrb[0].mxu0
  %v623 = vpop.f32.mrb[0].mxu0
  %v624 = vpop.f32.mrb[0].mxu0
  %625 = vdwg.mxu0
  %628 = vrot.lane.b32.xlu0 %v573, 16
  %v629 = vpop.permute.xlu0 %628
  %630 = vrot.lane.b32.xlu0 %v621, 16
  %v631 = vpop.permute.xlu0 %630
  %v634 = vsel %vm168, %v349, %v629
  %v635 = vsel %vm168, %v397, %v631
  %v636 = vld [vmem:[%s5] sm:$0xf]
  %v637 = vld [vmem:[%s5 + $0x4] sm:$0xf]
  %v638 = vld [vmem:[%s5 + $0x8] sm:$0xf]
  %v639 = vld [vmem:[%s5 + $0xc] sm:$0xf]
  %v640 = vpack.c.bf16 %v635, %v634
  %v641 = vlaneseq
  %v642 = vshrl.u32 %v641, 7
  %v643 = vsub.s32 0, %v642
  %v644 = vrot.slane %v94, %v643
  %v649 = vunpack.c.l.b16 %v636
  %v650 = vunpack.c.l.b16 %v637
  %v651 = vunpack.c.l.b16 %v638
  %v652 = vunpack.c.l.b16 %v639
  %v653 = vpack.c.b16 %v650, %v649
  %v654 = vpack.c.b16 %v652, %v651
  %v658 = vsel %vm54, %v640, 0
  %660 = vmatprep.subr.bf16.mxu0 0
  %661 = vmatpush1.bf16.msra.mxu0 %v653
  %662 = vmatprep.subr.bf16.mxu0 0
  %663 = vmatpush1.bf16.msra.mxu0 %v654
  %664 = vmatprep.subr.bf16.mxu0 0
  %665 = vmatpush1.bf16.msra.mxu0 0
  %666 = vmatprep.subr.bf16.mxu0 0
  %667 = vmatpush1.bf16.msra.mxu0 0
  %668 = vmatprep.subr.bf16.mxu0 0
  %669 = vmatpush1.bf16.msra.mxu0 0
  %670 = vmatprep.subr.bf16.mxu0 0
  %671 = vmatpush1.bf16.msra.mxu0 0
  %672 = vmatprep.subr.bf16.mxu0 0
  %673 = vmatpush1.bf16.msra.mxu0 0
  %674 = vmatprep.subr.bf16.mxu0 0
  %675 = vmatpush1.bf16.msra.mxu0 0
  %676 = vmatprep.subr.bf16.mxu0 0
  %677 = vmatpush1.bf16.msra.mxu0 0
  %678 = vmatprep.subr.bf16.mxu0 0
  %679 = vmatpush1.bf16.msra.mxu0 0
  %680 = vmatprep.subr.bf16.mxu0 0
  %681 = vmatpush1.bf16.msra.mxu0 0
  %682 = vmatprep.subr.bf16.mxu0 0
  %683 = vmatpush1.bf16.msra.mxu0 0
  %684 = vmatprep.subr.bf16.mxu0 0
  %685 = vmatpush1.bf16.msra.mxu0 0
  %686 = vmatprep.subr.bf16.mxu0 0
  %687 = vmatpush1.bf16.msra.mxu0 0
  %688 = vmatprep.subr.bf16.mxu0 0
  %689 = vmatpush1.bf16.msra.mxu0 0
  %690 = vmatprep.subr.bf16.mxu0 0
  %691 = vmatpush1.bf16.msra.mxu0 0
  %692 = vmatprep.mubr.bf16.mxu0 0
  %693 = vmatmul.mubr.bf16.gmra.mrb[0].mxu0 %v658
  %v694 = vpop.f32.mrb[0].mxu0
  %v695 = vadd.f32 %v644, %v694
  %v696 = vpop.f32.mrb[0].mxu0
  %v697 = vpop.f32.mrb[0].mxu0
  %v698 = vadd.f32 %v644, %v697
  %v699 = vpop.f32.mrb[0].mxu0
  %700 = vdwg.mxu0
  %v701 = vadd.f32 %v92, %v695
  %v702 = vadd.f32 %v93, %v698
  %v703 = vsel %vm54, %v701, 0.0
  %704 = vadd.xlane.f32.xlu0 %v703
  %v705 = vpop.xlane.xlu0 %704
  %v706 = vsel %vm54, %v702, 0.0
  %707 = vadd.xlane.f32.xlu0 %v706
  %v708 = vpop.xlane.xlu0 %707
  %v709 = vmul.f32 %v705, %v61
  %v710 = vmul.f32 %v708, %v61
  %v711 = vsub.f32 %v701, %v709
  %v712 = vsub.f32 %v702, %v710
  %v713 = vmul.f32 %v711, %v711
  %v714 = vmul.f32 %v712, %v712
  %v715 = vsel %vm54, %v713, 0.0
  %716 = vadd.xlane.f32.xlu0 %v715
  %v717 = vpop.xlane.xlu0 %716
  %v718 = vsel %vm54, %v714, 0.0
  %719 = vadd.xlane.f32.xlu0 %v718
  %v720 = vpop.xlane.xlu0 %719
  %v721 = vmul.f32 %v717, %v61
  %v722 = vmul.f32 %v720, %v61
  %v723 = vadd.f32 %v721, 1e-12
  %v724 = vadd.f32 %v722, 1e-12
  %v725 = vrsqrt.pop %v723
  %v726 = vrsqrt.pop %v724
  %v727 = vmul.f32 %v711, %v725
  %v728 = vmul.f32 %v712, %v726
  %v729 = vlaneseq
  %v730 = vshrl.u32 %v729, 7
  %v731 = vsub.s32 1, %v730
  %v732 = vrot.slane %v94, %v731
  %v733 = vmul.f32 %v727, %v732
  %v734 = vmul.f32 %v728, %v732
  %v735 = vlaneseq
  %v736 = vshrl.u32 %v735, 7
  %v737 = vsub.s32 2, %v736
  %v738 = vrot.slane %v94, %v737
  %v739 = vadd.f32 %v733, %v738
  %v740 = vadd.f32 %v734, %v738
  %v741 = vld [vmem:[%s7] sm:$0xf]
  %v742 = vld [vmem:[%s7 + $0x4] sm:$0xf]
  %v743 = vld [vmem:[%s7 + $0x8] sm:$0xf]
  %v744 = vld [vmem:[%s7 + $0xc] sm:$0xf]
  %v745 = vpack.c.bf16 %v740, %v739
  %v746 = vld [vmem:[%s8] sm:$0x1]
  %v748 = vlaneseq
  %v749 = vshrl.u32 %v748, 7
  %v750 = vsub.s32 0, %v749
  %v751 = vrot.slane %v746, %v750
  %v757 = vunpack.c.l.b16 %v741
  %v758 = vunpack.c.l.b16 %v742
  %v759 = vunpack.c.l.b16 %v743
  %v760 = vunpack.c.l.b16 %v744
  %v761 = vpack.c.b16 %v758, %v757
  %v762 = vpack.c.b16 %v760, %v759
  %v766 = vsel %vm54, %v745, 0
  %768 = vmatprep.subr.bf16.mxu0 0
  %769 = vmatpush1.bf16.msra.mxu0 %v761
  %770 = vmatprep.subr.bf16.mxu0 0
  %771 = vmatpush1.bf16.msra.mxu0 %v762
  %772 = vmatprep.subr.bf16.mxu0 0
  %773 = vmatpush1.bf16.msra.mxu0 0
  %774 = vmatprep.subr.bf16.mxu0 0
  %775 = vmatpush1.bf16.msra.mxu0 0
  %776 = vmatprep.subr.bf16.mxu0 0
  %777 = vmatpush1.bf16.msra.mxu0 0
  %778 = vmatprep.subr.bf16.mxu0 0
  %779 = vmatpush1.bf16.msra.mxu0 0
  %780 = vmatprep.subr.bf16.mxu0 0
  %781 = vmatpush1.bf16.msra.mxu0 0
  %782 = vmatprep.subr.bf16.mxu0 0
  %783 = vmatpush1.bf16.msra.mxu0 0
  %784 = vmatprep.subr.bf16.mxu0 0
  %785 = vmatpush1.bf16.msra.mxu0 0
  %786 = vmatprep.subr.bf16.mxu0 0
  %787 = vmatpush1.bf16.msra.mxu0 0
  %788 = vmatprep.subr.bf16.mxu0 0
  %789 = vmatpush1.bf16.msra.mxu0 0
  %790 = vmatprep.subr.bf16.mxu0 0
  %791 = vmatpush1.bf16.msra.mxu0 0
  %792 = vmatprep.subr.bf16.mxu0 0
  %793 = vmatpush1.bf16.msra.mxu0 0
  %794 = vmatprep.subr.bf16.mxu0 0
  %795 = vmatpush1.bf16.msra.mxu0 0
  %796 = vmatprep.subr.bf16.mxu0 0
  %797 = vmatpush1.bf16.msra.mxu0 0
  %798 = vmatprep.subr.bf16.mxu0 0
  %799 = vmatpush1.bf16.msra.mxu0 0
  %800 = vmatprep.mubr.bf16.mxu0 0
  %801 = vmatmul.mubr.bf16.gmra.mrb[0].mxu0 %v766
  %v802 = vpop.f32.mrb[0].mxu0
  %v803 = vadd.f32 %v751, %v802
  %v804 = vpop.f32.mrb[0].mxu0
  %v805 = vpop.f32.mrb[0].mxu0
  %v806 = vadd.f32 %v751, %v805
  %v807 = vpop.f32.mrb[0].mxu0
  %808 = vdwg.mxu0
  %v809 = vmul.f32 %v803, 0.5
  %v810 = vmul.f32 %v806, 0.5
  %v811 = vmul.f32 %v803, 0.044715
  %v812 = vmul.f32 %v806, 0.044715
  %v813 = vmul.f32 %v811, %v803
  %v814 = vmul.f32 %v812, %v806
  %v815 = vmul.f32 %v813, %v803
  %v816 = vmul.f32 %v814, %v806
  %v817 = vadd.f32 %v803, %v815
  %v818 = vadd.f32 %v806, %v816
  %v819 = vmul.f32 %v817, 0.7978846
  %v820 = vmul.f32 %v818, 0.7978846
  %v821 = vtanh.pop %v819
  %v822 = vtanh.pop %v820
  %v823 = vadd.f32 %v821, 1.0
  %v824 = vadd.f32 %v822, 1.0
  %v825 = vmul.f32 %v809, %v823
  %v826 = vmul.f32 %v810, %v824
  %v827 = vld [vmem:[%s9] sm:$0xf]
  %v828 = vld [vmem:[%s9 + $0x4] sm:$0xf]
  %v829 = vld [vmem:[%s9 + $0x8] sm:$0xf]
  %v830 = vld [vmem:[%s9 + $0xc] sm:$0xf]
  %v831 = vld [vmem:[%s9 + $0x10] sm:$0xf]
  %v832 = vld [vmem:[%s9 + $0x14] sm:$0xf]
  %v833 = vld [vmem:[%s9 + $0x18] sm:$0xf]
  %v834 = vld [vmem:[%s9 + $0x1c] sm:$0xf]
  %v835 = vpack.c.bf16 %v826, %v825
  %v836 = vlaneseq
  %v837 = vshrl.u32 %v836, 7
  %v838 = vsub.s32 3, %v837
  %v839 = vrot.slane %v94, %v838
  %v848 = vunpack.c.l.b16 %v827
  %v849 = vunpack.c.l.b16 %v828
  %v850 = vunpack.c.l.b16 %v829
  %v851 = vunpack.c.l.b16 %v830
  %v852 = vunpack.c.l.b16 %v831
  %v853 = vunpack.c.l.b16 %v832
  %v854 = vunpack.c.l.b16 %v833
  %v855 = vunpack.c.l.b16 %v834
  %v856 = vpack.c.b16 %v849, %v848
  %v857 = vpack.c.b16 %v851, %v850
  %v858 = vpack.c.b16 %v853, %v852
  %v859 = vpack.c.b16 %v855, %v854
  %vm864 = vcmask 523264
  %v866 = vsel %vm864, %v835, 0
  %868 = vmatprep.subr.bf16.mxu0 0
  %869 = vmatpush1.bf16.msra.mxu0 %v856
  %870 = vmatprep.subr.bf16.mxu0 0
  %871 = vmatpush1.bf16.msra.mxu0 %v857
  %872 = vmatprep.subr.bf16.mxu0 0
  %873 = vmatpush1.bf16.msra.mxu0 %v858
  %874 = vmatprep.subr.bf16.mxu0 0
  %875 = vmatpush1.bf16.msra.mxu0 %v859
  %876 = vmatprep.subr.bf16.mxu0 0
  %877 = vmatpush1.bf16.msra.mxu0 0
  %878 = vmatprep.subr.bf16.mxu0 0
  %879 = vmatpush1.bf16.msra.mxu0 0
  %880 = vmatprep.subr.bf16.mxu0 0
  %881 = vmatpush1.bf16.msra.mxu0 0
  %882 = vmatprep.subr.bf16.mxu0 0
  %883 = vmatpush1.bf16.msra.mxu0 0
  %884 = vmatprep.subr.bf16.mxu0 0
  %885 = vmatpush1.bf16.msra.mxu0 0
  %886 = vmatprep.subr.bf16.mxu0 0
  %887 = vmatpush1.bf16.msra.mxu0 0
  %888 = vmatprep.subr.bf16.mxu0 0
  %889 = vmatpush1.bf16.msra.mxu0 0
  %890 = vmatprep.subr.bf16.mxu0 0
  %891 = vmatpush1.bf16.msra.mxu0 0
  %892 = vmatprep.subr.bf16.mxu0 0
  %893 = vmatpush1.bf16.msra.mxu0 0
  %894 = vmatprep.subr.bf16.mxu0 0
  %895 = vmatpush1.bf16.msra.mxu0 0
  %896 = vmatprep.subr.bf16.mxu0 0
  %897 = vmatpush1.bf16.msra.mxu0 0
  %898 = vmatprep.subr.bf16.mxu0 0
  %899 = vmatpush1.bf16.msra.mxu0 0
  %900 = vmatprep.mubr.bf16.mxu0 0
  %901 = vmatmul.mubr.bf16.gmra.mrb[0].mxu0 %v866
  %v902 = vpop.f32.mrb[0].mxu0
  %v903 = vadd.f32 %v839, %v902
  %v904 = vpop.f32.mrb[0].mxu0
  %v905 = vpop.f32.mrb[0].mxu0
  %v906 = vadd.f32 %v839, %v905
  %v907 = vpop.f32.mrb[0].mxu0
  %908 = vdwg.mxu0
  %v909 = vadd.f32 %v739, %v903
  %v910 = vadd.f32 %v740, %v906
  %v911 = vsel %vm54, %v909, 0.0
  %912 = vadd.xlane.f32.xlu0 %v911
  %v913 = vpop.xlane.xlu0 %912
  %v914 = vsel %vm54, %v910, 0.0
  %915 = vadd.xlane.f32.xlu0 %v914
  %v916 = vpop.xlane.xlu0 %915
  %v917 = vmul.f32 %v913, %v61
  %v918 = vmul.f32 %v916, %v61
  %v919 = vsub.f32 %v909, %v917
  %v920 = vsub.f32 %v910, %v918
  %v921 = vmul.f32 %v919, %v919
  %v922 = vmul.f32 %v920, %v920
  %v923 = vsel %vm54, %v921, 0.0
  %924 = vadd.xlane.f32.xlu0 %v923
  %v925 = vpop.xlane.xlu0 %924
  %v926 = vsel %vm54, %v922, 0.0
  %927 = vadd.xlane.f32.xlu0 %v926
  %v928 = vpop.xlane.xlu0 %927
  %v929 = vmul.f32 %v925, %v61
  %v930 = vmul.f32 %v928, %v61
  %v931 = vadd.f32 %v929, 1e-12
  %v932 = vadd.f32 %v930, 1e-12
  %v933 = vrsqrt.pop %v931
  %v934 = vrsqrt.pop %v932
  %v935 = vmul.f32 %v919, %v933
  %v936 = vmul.f32 %v920, %v934
  %v937 = vlaneseq
  %v938 = vshrl.u32 %v937, 7
  %v939 = vsub.s32 4, %v938
  %v940 = vrot.slane %v94, %v939
  %v941 = vmul.f32 %v935, %v940
  %v942 = vmul.f32 %v936, %v940
  %v943 = vlaneseq
  %v944 = vshrl.u32 %v943, 7
  %v945 = vsub.s32 5, %v944
  %v946 = vrot.slane %v94, %v945
  %v947 = vadd.f32 %v941, %v946
  %v948 = vadd.f32 %v942, %v946
  %s949 = scalar_lea.vmem %s6, 8
  %v950 = vld [vmem:[%s949] sm:$0x3f]
  %s951 = scalar_lea.vmem %s3, 16
  %v952 = vld [vmem:[%s951] sm:$0xf]
  %v953 = vld [vmem:[%s951 + $0x4] sm:$0xf]
  %v954 = vld [vmem:[%s951 + $0x8] sm:$0xf]
  %v955 = vld [vmem:[%s951 + $0xc] sm:$0xf]
  %v956 = vpack.c.bf16 %v948, %v947
  %s957 = scalar_lea.vmem %s4, 1
  %v958 = vld [vmem:[%s957] sm:$0x1]
  %v960 = vlaneseq
  %v961 = vshrl.u32 %v960, 7
  %v962 = vsub.s32 0, %v961
  %v963 = vrot.slane %v958, %v962
  %v969 = vunpack.c.l.b16 %v952
  %v970 = vunpack.c.l.b16 %v953
  %v971 = vunpack.c.l.b16 %v954
  %v972 = vunpack.c.l.b16 %v955
  %v973 = vpack.c.b16 %v970, %v969
  %v974 = vpack.c.b16 %v972, %v971
  %v978 = vsel %vm54, %v956, 0
  %980 = vmatprep.subr.bf16.mxu0 0
  %981 = vmatpush1.bf16.msra.mxu0 %v973
  %982 = vmatprep.subr.bf16.mxu0 0
  %983 = vmatpush1.bf16.msra.mxu0 %v974
  %984 = vmatprep.subr.bf16.mxu0 0
  %985 = vmatpush1.bf16.msra.mxu0 0
  %986 = vmatprep.subr.bf16.mxu0 0
  %987 = vmatpush1.bf16.msra.mxu0 0
  %988 = vmatprep.subr.bf16.mxu0 0
  %989 = vmatpush1.bf16.msra.mxu0 0
  %990 = vmatprep.subr.bf16.mxu0 0
  %991 = vmatpush1.bf16.msra.mxu0 0
  %992 = vmatprep.subr.bf16.mxu0 0
  %993 = vmatpush1.bf16.msra.mxu0 0
  %994 = vmatprep.subr.bf16.mxu0 0
  %995 = vmatpush1.bf16.msra.mxu0 0
  %996 = vmatprep.subr.bf16.mxu0 0
  %997 = vmatpush1.bf16.msra.mxu0 0
  %998 = vmatprep.subr.bf16.mxu0 0
  %999 = vmatpush1.bf16.msra.mxu0 0
  %1000 = vmatprep.subr.bf16.mxu0 0
  %1001 = vmatpush1.bf16.msra.mxu0 0
  %1002 = vmatprep.subr.bf16.mxu0 0
  %1003 = vmatpush1.bf16.msra.mxu0 0
  %1004 = vmatprep.subr.bf16.mxu0 0
  %1005 = vmatpush1.bf16.msra.mxu0 0
  %1006 = vmatprep.subr.bf16.mxu0 0
  %1007 = vmatpush1.bf16.msra.mxu0 0
  %1008 = vmatprep.subr.bf16.mxu0 0
  %1009 = vmatpush1.bf16.msra.mxu0 0
  %1010 = vmatprep.subr.bf16.mxu0 0
  %1011 = vmatpush1.bf16.msra.mxu0 0
  %1012 = vmatprep.mubr.bf16.mxu0 0
  %1013 = vmatmul.mubr.bf16.gmra.mrb[0].mxu0 %v978
  %v1014 = vpop.f32.mrb[0].mxu0
  %v1015 = vadd.f32 %v963, %v1014
  %v1016 = vpop.f32.mrb[0].mxu0
  %v1017 = vpop.f32.mrb[0].mxu0
  %v1018 = vadd.f32 %v963, %v1017
  %v1019 = vpop.f32.mrb[0].mxu0
  %1020 = vdwg.mxu0
  %v1021 = vpack.c.bf16 %v1015, %v1015
  %v1022 = vpack.c.bf16 %v1018, %v1018
  %1024 = vrot.lane.b32.xlu0 %v1021, 96
  %v1025 = vpop.permute.xlu0 %1024
  %v1027 = vsel %vm168, %v1021, 0
  %v1030 = vsel %vm168, %v1025, 0
  %1032 = vmatprep.subr.bf16.mxu0 0
  %1033 = vmatpush1.bf16.xpose.msra.mxu0 %v1030
  %1034 = vmatprep.subr.bf16.mxu0 0
  %1035 = vmatpush1.bf16.xpose.msra.mxu0 0
  %1036 = vmatprep.subr.bf16.mxu0 0
  %1037 = vmatpush1.bf16.xpose.msra.mxu0 0
  %1038 = vmatprep.subr.bf16.mxu0 0
  %1039 = vmatpush1.bf16.xpose.msra.mxu0 0
  %1040 = vmatprep.subr.bf16.mxu0 0
  %1041 = vmatpush1.bf16.xpose.msra.mxu0 0
  %1042 = vmatprep.subr.bf16.mxu0 0
  %1043 = vmatpush1.bf16.xpose.msra.mxu0 0
  %1044 = vmatprep.subr.bf16.mxu0 0
  %1045 = vmatpush1.bf16.xpose.msra.mxu0 0
  %1046 = vmatprep.subr.bf16.mxu0 0
  %1047 = vmatpush1.bf16.xpose.msra.mxu0 0
  %1048 = vmatprep.subr.bf16.mxu0 0
  %1049 = vmatpush1.bf16.xpose.msra.mxu0 0
  %1050 = vmatprep.subr.bf16.mxu0 0
  %1051 = vmatpush1.bf16.xpose.msra.mxu0 0
  %1052 = vmatprep.subr.bf16.mxu0 0
  %1053 = vmatpush1.bf16.xpose.msra.mxu0 0
  %1054 = vmatprep.subr.bf16.mxu0 0
  %1055 = vmatpush1.bf16.xpose.msra.mxu0 0
  %1056 = vmatprep.subr.bf16.mxu0 0
  %1057 = vmatpush1.bf16.xpose.msra.mxu0 0
  %1058 = vmatprep.subr.bf16.mxu0 0
  %1059 = vmatpush1.bf16.xpose.msra.mxu0 0
  %1060 = vmatprep.subr.bf16.mxu0 0
  %1061 = vmatpush1.bf16.xpose.msra.mxu0 0
  %1062 = vmatprep.subr.bf16.mxu0 0
  %1063 = vmatpush1.bf16.xpose.msra.mxu0 0
  %1064 = vmatprep.mubr.bf16.mxu0 0
  %1065 = vmatmul.mubr.bf16.gmra.mrb[0].mxu0 %v1027
  %v1066 = vpop.f32.mrb[0].mxu0
  %v1067 = vadd.f32 0.0, %v1066
  %v1068 = vpop.f32.mrb[0].mxu0
  %v1069 = vpop.f32.mrb[0].mxu0
  %v1070 = vpop.f32.mrb[0].mxu0
  %1071 = vdwg.mxu0
  %1073 = vrot.lane.b32.xlu0 %v1022, 96
  %v1074 = vpop.permute.xlu0 %1073
  %v1076 = vsel %vm168, %v1022, 0
  %v1079 = vsel %vm168, %v1074, 0
  %1081 = vmatprep.subr.bf16.mxu0 0
  %1082 = vmatpush1.bf16.xpose.msra.mxu0 %v1079
  %1083 = vmatprep.subr.bf16.mxu0 0
  %1084 = vmatpush1.bf16.xpose.msra.mxu0 0
  %1085 = vmatprep.subr.bf16.mxu0 0
  %1086 = vmatpush1.bf16.xpose.msra.mxu0 0
  %1087 = vmatprep.subr.bf16.mxu0 0
  %1088 = vmatpush1.bf16.xpose.msra.mxu0 0
  %1089 = vmatprep.subr.bf16.mxu0 0
  %1090 = vmatpush1.bf16.xpose.msra.mxu0 0
  %1091 = vmatprep.subr.bf16.mxu0 0
  %1092 = vmatpush1.bf16.xpose.msra.mxu0 0
  %1093 = vmatprep.subr.bf16.mxu0 0
  %1094 = vmatpush1.bf16.xpose.msra.mxu0 0
  %1095 = vmatprep.subr.bf16.mxu0 0
  %1096 = vmatpush1.bf16.xpose.msra.mxu0 0
  %1097 = vmatprep.subr.bf16.mxu0 0
  %1098 = vmatpush1.bf16.xpose.msra.mxu0 0
  %1099 = vmatprep.subr.bf16.mxu0 0
  %1100 = vmatpush1.bf16.xpose.msra.mxu0 0
  %1101 = vmatprep.subr.bf16.mxu0 0
  %1102 = vmatpush1.bf16.xpose.msra.mxu0 0
  %1103 = vmatprep.subr.bf16.mxu0 0
  %1104 = vmatpush1.bf16.xpose.msra.mxu0 0
  %1105 = vmatprep.subr.bf16.mxu0 0
  %1106 = vmatpush1.bf16.xpose.msra.mxu0 0
  %1107 = vmatprep.subr.bf16.mxu0 0
  %1108 = vmatpush1.bf16.xpose.msra.mxu0 0
  %1109 = vmatprep.subr.bf16.mxu0 0
  %1110 = vmatpush1.bf16.xpose.msra.mxu0 0
  %1111 = vmatprep.subr.bf16.mxu0 0
  %1112 = vmatpush1.bf16.xpose.msra.mxu0 0
  %1113 = vmatprep.mubr.bf16.mxu0 0
  %1114 = vmatmul.mubr.bf16.gmra.mrb[0].mxu0 %v1076
  %v1115 = vpop.f32.mrb[0].mxu0
  %v1116 = vadd.f32 0.0, %v1115
  %v1117 = vpop.f32.mrb[0].mxu0
  %v1118 = vpop.f32.mrb[0].mxu0
  %v1119 = vpop.f32.mrb[0].mxu0
  %1120 = vdwg.mxu0
  %v1121 = vmul.f32 %v1067, 0.25
  %v1122 = vmul.f32 %v1116, 0.25
  %v1123 = vadd.f32 %v1121, %v271
  %v1124 = vadd.f32 %v1122, %v275
  %v1125 = vsel %vm280, %v1123, -inf
  %1126 = vmax.xlane.f32.xlu0 %v1125
  %v1127 = vpop.xlane.xlu0 %1126
  %v1128 = vsel %vm280, %v1124, -inf
  %1129 = vmax.xlane.f32.xlu0 %v1128
  %v1130 = vpop.xlane.xlu0 %1129
  %v1131 = vsub.f32 %v1123, %v1127
  %v1132 = vsub.f32 %v1124, %v1130
  %v1133 = vmul.f32 %v1131, 1.442695
  %v1134 = vpow.pop %v1133
  %v1135 = vmul.f32 %v1132, 1.442695
  %v1136 = vpow.pop %v1135
  %v1137 = vsel %vm280, %v1134, 0.0
  %1138 = vadd.xlane.f32.xlu0 %v1137
  %v1139 = vpop.xlane.xlu0 %1138
  %v1140 = vsel %vm280, %v1136, 0.0
  %1141 = vadd.xlane.f32.xlu0 %v1140
  %v1142 = vpop.xlane.xlu0 %1141
  %v1143 = vrcp.pop %v1139
  %v1144 = vrcp.pop %v1142
  %v1145 = vmul.f32 %v1134, %v1143
  %v1146 = vmul.f32 %v1136, %v1144
  %v1147 = vpack.c.bf16 %v1145, %v1145
  %v1148 = vpack.c.bf16 %v1146, %v1146
  %1149 = vrot.lane.b32.xlu0 %v1021, 64
  %v1150 = vpop.permute.xlu0 %1149
  %v1152 = vsel %vm280, %v1147, 0
  %v1155 = vsel %vm310, %v1150, 0
  %1157 = vmatprep.subr.bf16.mxu0 0
  %1158 = vmatpush1.bf16.msra.mxu0 %v1155
  %1159 = vmatprep.subr.bf16.mxu0 0
  %1160 = vmatpush1.bf16.msra.mxu0 0
  %1161 = vmatprep.subr.bf16.mxu0 0
  %1162 = vmatpush1.bf16.msra.mxu0 0
  %1163 = vmatprep.subr.bf16.mxu0 0
  %1164 = vmatpush1.bf16.msra.mxu0 0
  %1165 = vmatprep.subr.bf16.mxu0 0
  %1166 = vmatpush1.bf16.msra.mxu0 0
  %1167 = vmatprep.subr.bf16.mxu0 0
  %1168 = vmatpush1.bf16.msra.mxu0 0
  %1169 = vmatprep.subr.bf16.mxu0 0
  %1170 = vmatpush1.bf16.msra.mxu0 0
  %1171 = vmatprep.subr.bf16.mxu0 0
  %1172 = vmatpush1.bf16.msra.mxu0 0
  %1173 = vmatprep.subr.bf16.mxu0 0
  %1174 = vmatpush1.bf16.msra.mxu0 0
  %1175 = vmatprep.subr.bf16.mxu0 0
  %1176 = vmatpush1.bf16.msra.mxu0 0
  %1177 = vmatprep.subr.bf16.mxu0 0
  %1178 = vmatpush1.bf16.msra.mxu0 0
  %1179 = vmatprep.subr.bf16.mxu0 0
  %1180 = vmatpush1.bf16.msra.mxu0 0
  %1181 = vmatprep.subr.bf16.mxu0 0
  %1182 = vmatpush1.bf16.msra.mxu0 0
  %1183 = vmatprep.subr.bf16.mxu0 0
  %1184 = vmatpush1.bf16.msra.mxu0 0
  %1185 = vmatprep.subr.bf16.mxu0 0
  %1186 = vmatpush1.bf16.msra.mxu0 0
  %1187 = vmatprep.subr.bf16.mxu0 0
  %1188 = vmatpush1.bf16.msra.mxu0 0
  %1189 = vmatprep.mubr.bf16.mxu0 0
  %1190 = vmatmul.mubr.bf16.gmra.mrb[0].mxu0 %v1152
  %v1191 = vpop.f32.mrb[0].mxu0
  %v1192 = vadd.f32 0.0, %v1191
  %v1193 = vpop.f32.mrb[0].mxu0
  %v1194 = vpop.f32.mrb[0].mxu0
  %v1195 = vpop.f32.mrb[0].mxu0
  %1196 = vdwg.mxu0
  %1197 = vrot.lane.b32.xlu0 %v1022, 64
  %v1198 = vpop.permute.xlu0 %1197
  %v1200 = vsel %vm280, %v1148, 0
  %v1203 = vsel %vm310, %v1198, 0
  %1205 = vmatprep.subr.bf16.mxu0 0
  %1206 = vmatpush1.bf16.msra.mxu0 %v1203
  %1207 = vmatprep.subr.bf16.mxu0 0
  %1208 = vmatpush1.bf16.msra.mxu0 0
  %1209 = vmatprep.subr.bf16.mxu0 0
  %1210 = vmatpush1.bf16.msra.mxu0 0
  %1211 = vmatprep.subr.bf16.mxu0 0
  %1212 = vmatpush1.bf16.msra.mxu0 0
  %1213 = vmatprep.subr.bf16.mxu0 0
  %1214 = vmatpush1.bf16.msra.mxu0 0
  %1215 = vmatprep.subr.bf16.mxu0 0
  %1216 = vmatpush1.bf16.msra.mxu0 0
  %1217 = vmatprep.subr.bf16.mxu0 0
  %1218 = vmatpush1.bf16.msra.mxu0 0
  %1219 = vmatprep.subr.bf16.mxu0 0
  %1220 = vmatpush1.bf16.msra.mxu0 0
  %1221 = vmatprep.subr.bf16.mxu0 0
  %1222 = vmatpush1.bf16.msra.mxu0 0
  %1223 = vmatprep.subr.bf16.mxu0 0
  %1224 = vmatpush1.bf16.msra.mxu0 0
  %1225 = vmatprep.subr.bf16.mxu0 0
  %1226 = vmatpush1.bf16.msra.mxu0 0
  %1227 = vmatprep.subr.bf16.mxu0 0
  %1228 = vmatpush1.bf16.msra.mxu0 0
  %1229 = vmatprep.subr.bf16.mxu0 0
  %1230 = vmatpush1.bf16.msra.mxu0 0
  %1231 = vmatprep.subr.bf16.mxu0 0
  %1232 = vmatpush1.bf16.msra.mxu0 0
  %1233 = vmatprep.subr.bf16.mxu0 0
  %1234 = vmatpush1.bf16.msra.mxu0 0
  %1235 = vmatprep.subr.bf16.mxu0 0
  %1236 = vmatpush1.bf16.msra.mxu0 0
  %1237 = vmatprep.mubr.bf16.mxu0 0
  %1238 = vmatmul.mubr.bf16.gmra.mrb[0].mxu0 %v1200
  %v1239 = vpop.f32.mrb[0].mxu0
  %v1240 = vadd.f32 0.0, %v1239
  %v1241 = vpop.f32.mrb[0].mxu0
  %v1242 = vpop.f32.mrb[0].mxu0
  %v1243 = vpop.f32.mrb[0].mxu0
  %1244 = vdwg.mxu0
  %1245 = vrot.lane.b32.xlu0 %v1021, 112
  %v1246 = vpop.permute.xlu0 %1245
  %1247 = vrot.lane.b32.xlu0 %v1021, 80
  %v1248 = vpop.permute.xlu0 %1247
  %v1250 = vsel %vm168, %v1246, 0
  %v1253 = vsel %vm168, %v1248, 0
  %1255 = vmatprep.subr.bf16.mxu0 0
  %1256 = vmatpush1.bf16.xpose.msra.mxu0 %v1253
  %1257 = vmatprep.subr.bf16.mxu0 0
  %1258 = vmatpush1.bf16.xpose.msra.mxu0 0
  %1259 = vmatprep.subr.bf16.mxu0 0
  %1260 = vmatpush1.bf16.xpose.msra.mxu0 0
  %1261 = vmatprep.subr.bf16.mxu0 0
  %1262 = vmatpush1.bf16.xpose.msra.mxu0 0
  %1263 = vmatprep.subr.bf16.mxu0 0
  %1264 = vmatpush1.bf16.xpose.msra.mxu0 0
  %1265 = vmatprep.subr.bf16.mxu0 0
  %1266 = vmatpush1.bf16.xpose.msra.mxu0 0
  %1267 = vmatprep.subr.bf16.mxu0 0
  %1268 = vmatpush1.bf16.xpose.msra.mxu0 0
  %1269 = vmatprep.subr.bf16.mxu0 0
  %1270 = vmatpush1.bf16.xpose.msra.mxu0 0
  %1271 = vmatprep.subr.bf16.mxu0 0
  %1272 = vmatpush1.bf16.xpose.msra.mxu0 0
  %1273 = vmatprep.subr.bf16.mxu0 0
  %1274 = vmatpush1.bf16.xpose.msra.mxu0 0
  %1275 = vmatprep.subr.bf16.mxu0 0
  %1276 = vmatpush1.bf16.xpose.msra.mxu0 0
  %1277 = vmatprep.subr.bf16.mxu0 0
  %1278 = vmatpush1.bf16.xpose.msra.mxu0 0
  %1279 = vmatprep.subr.bf16.mxu0 0
  %1280 = vmatpush1.bf16.xpose.msra.mxu0 0
  %1281 = vmatprep.subr.bf16.mxu0 0
  %1282 = vmatpush1.bf16.xpose.msra.mxu0 0
  %1283 = vmatprep.subr.bf16.mxu0 0
  %1284 = vmatpush1.bf16.xpose.msra.mxu0 0
  %1285 = vmatprep.subr.bf16.mxu0 0
  %1286 = vmatpush1.bf16.xpose.msra.mxu0 0
  %1287 = vmatprep.mubr.bf16.mxu0 0
  %1288 = vmatmul.mubr.bf16.gmra.mrb[0].mxu0 %v1250
  %v1289 = vpop.f32.mrb[0].mxu0
  %v1290 = vadd.f32 0.0, %v1289
  %v1291 = vpop.f32.mrb[0].mxu0
  %v1292 = vpop.f32.mrb[0].mxu0
  %v1293 = vpop.f32.mrb[0].mxu0
  %1294 = vdwg.mxu0
  %1295 = vrot.lane.b32.xlu0 %v1022, 112
  %v1296 = vpop.permute.xlu0 %1295
  %1297 = vrot.lane.b32.xlu0 %v1022, 80
  %v1298 = vpop.permute.xlu0 %1297
  %v1300 = vsel %vm168, %v1296, 0
  %v1303 = vsel %vm168, %v1298, 0
  %1305 = vmatprep.subr.bf16.mxu0 0
  %1306 = vmatpush1.bf16.xpose.msra.mxu0 %v1303
  %1307 = vmatprep.subr.bf16.mxu0 0
  %1308 = vmatpush1.bf16.xpose.msra.mxu0 0
  %1309 = vmatprep.subr.bf16.mxu0 0
  %1310 = vmatpush1.bf16.xpose.msra.mxu0 0
  %1311 = vmatprep.subr.bf16.mxu0 0
  %1312 = vmatpush1.bf16.xpose.msra.mxu0 0
  %1313 = vmatprep.subr.bf16.mxu0 0
  %1314 = vmatpush1.bf16.xpose.msra.mxu0 0
  %1315 = vmatprep.subr.bf16.mxu0 0
  %1316 = vmatpush1.bf16.xpose.msra.mxu0 0
  %1317 = vmatprep.subr.bf16.mxu0 0
  %1318 = vmatpush1.bf16.xpose.msra.mxu0 0
  %1319 = vmatprep.subr.bf16.mxu0 0
  %1320 = vmatpush1.bf16.xpose.msra.mxu0 0
  %1321 = vmatprep.subr.bf16.mxu0 0
  %1322 = vmatpush1.bf16.xpose.msra.mxu0 0
  %1323 = vmatprep.subr.bf16.mxu0 0
  %1324 = vmatpush1.bf16.xpose.msra.mxu0 0
  %1325 = vmatprep.subr.bf16.mxu0 0
  %1326 = vmatpush1.bf16.xpose.msra.mxu0 0
  %1327 = vmatprep.subr.bf16.mxu0 0
  %1328 = vmatpush1.bf16.xpose.msra.mxu0 0
  %1329 = vmatprep.subr.bf16.mxu0 0
  %1330 = vmatpush1.bf16.xpose.msra.mxu0 0
  %1331 = vmatprep.subr.bf16.mxu0 0
  %1332 = vmatpush1.bf16.xpose.msra.mxu0 0
  %1333 = vmatprep.subr.bf16.mxu0 0
  %1334 = vmatpush1.bf16.xpose.msra.mxu0 0
  %1335 = vmatprep.subr.bf16.mxu0 0
  %1336 = vmatpush1.bf16.xpose.msra.mxu0 0
  %1337 = vmatprep.mubr.bf16.mxu0 0
  %1338 = vmatmul.mubr.bf16.gmra.mrb[0].mxu0 %v1300
  %v1339 = vpop.f32.mrb[0].mxu0
  %v1340 = vadd.f32 0.0, %v1339
  %v1341 = vpop.f32.mrb[0].mxu0
  %v1342 = vpop.f32.mrb[0].mxu0
  %v1343 = vpop.f32.mrb[0].mxu0
  %1344 = vdwg.mxu0
  %v1345 = vmul.f32 %v1290, 0.25
  %v1346 = vmul.f32 %v1340, 0.25
  %v1347 = vadd.f32 %v1345, %v271
  %v1348 = vadd.f32 %v1346, %v275
  %v1349 = vsel %vm280, %v1347, -inf
  %1350 = vmax.xlane.f32.xlu0 %v1349
  %v1351 = vpop.xlane.xlu0 %1350
  %v1352 = vsel %vm280, %v1348, -inf
  %1353 = vmax.xlane.f32.xlu0 %v1352
  %v1354 = vpop.xlane.xlu0 %1353
  %v1355 = vsub.f32 %v1347, %v1351
  %v1356 = vsub.f32 %v1348, %v1354
  %v1357 = vmul.f32 %v1355, 1.442695
  %v1358 = vpow.pop %v1357
  %v1359 = vmul.f32 %v1356, 1.442695
  %v1360 = vpow.pop %v1359
  %v1361 = vsel %vm280, %v1358, 0.0
  %1362 = vadd.xlane.f32.xlu0 %v1361
  %v1363 = vpop.xlane.xlu0 %1362
  %v1364 = vsel %vm280, %v1360, 0.0
  %1365 = vadd.xlane.f32.xlu0 %v1364
  %v1366 = vpop.xlane.xlu0 %1365
  %v1367 = vrcp.pop %v1363
  %v1368 = vrcp.pop %v1366
  %v1369 = vmul.f32 %v1358, %v1367
  %v1370 = vmul.f32 %v1360, %v1368
  %v1371 = vpack.c.bf16 %v1369, %v1369
  %v1372 = vpack.c.bf16 %v1370, %v1370
  %1373 = vrot.lane.b32.xlu0 %v1021, 48
  %v1374 = vpop.permute.xlu0 %1373
  %v1376 = vsel %vm280, %v1371, 0
  %v1379 = vsel %vm310, %v1374, 0
  %1381 = vmatprep.subr.bf16.mxu0 0
  %1382 = vmatpush1.bf16.msra.mxu0 %v1379
  %1383 = vmatprep.subr.bf16.mxu0 0
  %1384 = vmatpush1.bf16.msra.mxu0 0
  %1385 = vmatprep.subr.bf16.mxu0 0
  %1386 = vmatpush1.bf16.msra.mxu0 0
  %1387 = vmatprep.subr.bf16.mxu0 0
  %1388 = vmatpush1.bf16.msra.mxu0 0
  %1389 = vmatprep.subr.bf16.mxu0 0
  %1390 = vmatpush1.bf16.msra.mxu0 0
  %1391 = vmatprep.subr.bf16.mxu0 0
  %1392 = vmatpush1.bf16.msra.mxu0 0
  %1393 = vmatprep.subr.bf16.mxu0 0
  %1394 = vmatpush1.bf16.msra.mxu0 0
  %1395 = vmatprep.subr.bf16.mxu0 0
  %1396 = vmatpush1.bf16.msra.mxu0 0
  %1397 = vmatprep.subr.bf16.mxu0 0
  %1398 = vmatpush1.bf16.msra.mxu0 0
  %1399 = vmatprep.subr.bf16.mxu0 0
  %1400 = vmatpush1.bf16.msra.mxu0 0
  %1401 = vmatprep.subr.bf16.mxu0 0
  %1402 = vmatpush1.bf16.msra.mxu0 0
  %1403 = vmatprep.subr.bf16.mxu0 0
  %1404 = vmatpush1.bf16.msra.mxu0 0
  %1405 = vmatprep.subr.bf16.mxu0 0
  %1406 = vmatpush1.bf16.msra.mxu0 0
  %1407 = vmatprep.subr.bf16.mxu0 0
  %1408 = vmatpush1.bf16.msra.mxu0 0
  %1409 = vmatprep.subr.bf16.mxu0 0
  %1410 = vmatpush1.bf16.msra.mxu0 0
  %1411 = vmatprep.subr.bf16.mxu0 0
  %1412 = vmatpush1.bf16.msra.mxu0 0
  %1413 = vmatprep.mubr.bf16.mxu0 0
  %1414 = vmatmul.mubr.bf16.gmra.mrb[0].mxu0 %v1376
  %v1415 = vpop.f32.mrb[0].mxu0
  %v1416 = vadd.f32 0.0, %v1415
  %v1417 = vpop.f32.mrb[0].mxu0
  %v1418 = vpop.f32.mrb[0].mxu0
  %v1419 = vpop.f32.mrb[0].mxu0
  %1420 = vdwg.mxu0
  %1421 = vrot.lane.b32.xlu0 %v1022, 48
  %v1422 = vpop.permute.xlu0 %1421
  %v1424 = vsel %vm280, %v1372, 0
  %v1427 = vsel %vm310, %v1422, 0
  %1429 = vmatprep.subr.bf16.mxu0 0
  %1430 = vmatpush1.bf16.msra.mxu0 %v1427
  %1431 = vmatprep.subr.bf16.mxu0 0
  %1432 = vmatpush1.bf16.msra.mxu0 0
  %1433 = vmatprep.subr.bf16.mxu0 0
  %1434 = vmatpush1.bf16.msra.mxu0 0
  %1435 = vmatprep.subr.bf16.mxu0 0
  %1436 = vmatpush1.bf16.msra.mxu0 0
  %1437 = vmatprep.subr.bf16.mxu0 0
  %1438 = vmatpush1.bf16.msra.mxu0 0
  %1439 = vmatprep.subr.bf16.mxu0 0
  %1440 = vmatpush1.bf16.msra.mxu0 0
  %1441 = vmatprep.subr.bf16.mxu0 0
  %1442 = vmatpush1.bf16.msra.mxu0 0
  %1443 = vmatprep.subr.bf16.mxu0 0
  %1444 = vmatpush1.bf16.msra.mxu0 0
  %1445 = vmatprep.subr.bf16.mxu0 0
  %1446 = vmatpush1.bf16.msra.mxu0 0
  %1447 = vmatprep.subr.bf16.mxu0 0
  %1448 = vmatpush1.bf16.msra.mxu0 0
  %1449 = vmatprep.subr.bf16.mxu0 0
  %1450 = vmatpush1.bf16.msra.mxu0 0
  %1451 = vmatprep.subr.bf16.mxu0 0
  %1452 = vmatpush1.bf16.msra.mxu0 0
  %1453 = vmatprep.subr.bf16.mxu0 0
  %1454 = vmatpush1.bf16.msra.mxu0 0
  %1455 = vmatprep.subr.bf16.mxu0 0
  %1456 = vmatpush1.bf16.msra.mxu0 0
  %1457 = vmatprep.subr.bf16.mxu0 0
  %1458 = vmatpush1.bf16.msra.mxu0 0
  %1459 = vmatprep.subr.bf16.mxu0 0
  %1460 = vmatpush1.bf16.msra.mxu0 0
  %1461 = vmatprep.mubr.bf16.mxu0 0
  %1462 = vmatmul.mubr.bf16.gmra.mrb[0].mxu0 %v1424
  %v1463 = vpop.f32.mrb[0].mxu0
  %v1464 = vadd.f32 0.0, %v1463
  %v1465 = vpop.f32.mrb[0].mxu0
  %v1466 = vpop.f32.mrb[0].mxu0
  %v1467 = vpop.f32.mrb[0].mxu0
  %1468 = vdwg.mxu0
  %1471 = vrot.lane.b32.xlu0 %v1416, 16
  %v1472 = vpop.permute.xlu0 %1471
  %1473 = vrot.lane.b32.xlu0 %v1464, 16
  %v1474 = vpop.permute.xlu0 %1473
  %v1477 = vsel %vm168, %v1192, %v1472
  %v1478 = vsel %vm168, %v1240, %v1474
  %s1479 = scalar_lea.vmem %s5, 16
  %v1480 = vld [vmem:[%s1479] sm:$0xf]
  %v1481 = vld [vmem:[%s1479 + $0x4] sm:$0xf]
  %v1482 = vld [vmem:[%s1479 + $0x8] sm:$0xf]
  %v1483 = vld [vmem:[%s1479 + $0xc] sm:$0xf]
  %v1484 = vpack.c.bf16 %v1478, %v1477
  %v1485 = vlaneseq
  %v1486 = vshrl.u32 %v1485, 7
  %v1487 = vsub.s32 0, %v1486
  %v1488 = vrot.slane %v950, %v1487
  %v1493 = vunpack.c.l.b16 %v1480
  %v1494 = vunpack.c.l.b16 %v1481
  %v1495 = vunpack.c.l.b16 %v1482
  %v1496 = vunpack.c.l.b16 %v1483
  %v1497 = vpack.c.b16 %v1494, %v1493
  %v1498 = vpack.c.b16 %v1496, %v1495
  %v1502 = vsel %vm54, %v1484, 0
  %1504 = vmatprep.subr.bf16.mxu0 0
  %1505 = vmatpush1.bf16.msra.mxu0 %v1497
  %1506 = vmatprep.subr.bf16.mxu0 0
  %1507 = vmatpush1.bf16.msra.mxu0 %v1498
  %1508 = vmatprep.subr.bf16.mxu0 0
  %1509 = vmatpush1.bf16.msra.mxu0 0
  %1510 = vmatprep.subr.bf16.mxu0 0
  %1511 = vmatpush1.bf16.msra.mxu0 0
  %1512 = vmatprep.subr.bf16.mxu0 0
  %1513 = vmatpush1.bf16.msra.mxu0 0
  %1514 = vmatprep.subr.bf16.mxu0 0
  %1515 = vmatpush1.bf16.msra.mxu0 0
  %1516 = vmatprep.subr.bf16.mxu0 0
  %1517 = vmatpush1.bf16.msra.mxu0 0
  %1518 = vmatprep.subr.bf16.mxu0 0
  %1519 = vmatpush1.bf16.msra.mxu0 0
  %1520 = vmatprep.subr.bf16.mxu0 0
  %1521 = vmatpush1.bf16.msra.mxu0 0
  %1522 = vmatprep.subr.bf16.mxu0 0
  %1523 = vmatpush1.bf16.msra.mxu0 0
  %1524 = vmatprep.subr.bf16.mxu0 0
  %1525 = vmatpush1.bf16.msra.mxu0 0
  %1526 = vmatprep.subr.bf16.mxu0 0
  %1527 = vmatpush1.bf16.msra.mxu0 0
  %1528 = vmatprep.subr.bf16.mxu0 0
  %1529 = vmatpush1.bf16.msra.mxu0 0
  %1530 = vmatprep.subr.bf16.mxu0 0
  %1531 = vmatpush1.bf16.msra.mxu0 0
  %1532 = vmatprep.subr.bf16.mxu0 0
  %1533 = vmatpush1.bf16.msra.mxu0 0
  %1534 = vmatprep.subr.bf16.mxu0 0
  %1535 = vmatpush1.bf16.msra.mxu0 0
  %1536 = vmatprep.mubr.bf16.mxu0 0
  %1537 = vmatmul.mubr.bf16.gmra.mrb[0].mxu0 %v1502
  %v1538 = vpop.f32.mrb[0].mxu0
  %v1539 = vadd.f32 %v1488, %v1538
  %v1540 = vpop.f32.mrb[0].mxu0
  %v1541 = vpop.f32.mrb[0].mxu0
  %v1542 = vadd.f32 %v1488, %v1541
  %v1543 = vpop.f32.mrb[0].mxu0
  %1544 = vdwg.mxu0
  %v1545 = vadd.f32 %v947, %v1539
  %v1546 = vadd.f32 %v948, %v1542
  %v1547 = vsel %vm54, %v1545, 0.0
  %1548 = vadd.xlane.f32.xlu0 %v1547
  %v1549 = vpop.xlane.xlu0 %1548
  %v1550 = vsel %vm54, %v1546, 0.0
  %1551 = vadd.xlane.f32.xlu0 %v1550
  %v1552 = vpop.xlane.xlu0 %1551
  %v1553 = vmul.f32 %v1549, %v61
  %v1554 = vmul.f32 %v1552, %v61
  %v1555 = vsub.f32 %v1545, %v1553
  %v1556 = vsub.f32 %v1546, %v1554
  %v1557 = vmul.f32 %v1555, %v1555
  %v1558 = vmul.f32 %v1556, %v1556
  %v1559 = vsel %vm54, %v1557, 0.0
  %1560 = vadd.xlane.f32.xlu0 %v1559
  %v1561 = vpop.xlane.xlu0 %1560
  %v1562 = vsel %vm54, %v1558, 0.0
  %1563 = vadd.xlane.f32.xlu0 %v1562
  %v1564 = vpop.xlane.xlu0 %1563
  %v1565 = vmul.f32 %v1561, %v61
  %v1566 = vmul.f32 %v1564, %v61
  %v1567 = vadd.f32 %v1565, 1e-12
  %v1568 = vadd.f32 %v1566, 1e-12
  %v1569 = vrsqrt.pop %v1567
  %v1570 = vrsqrt.pop %v1568
  %v1571 = vmul.f32 %v1555, %v1569
  %v1572 = vmul.f32 %v1556, %v1570
  %v1573 = vlaneseq
  %v1574 = vshrl.u32 %v1573, 7
  %v1575 = vsub.s32 1, %v1574
  %v1576 = vrot.slane %v950, %v1575
  %v1577 = vmul.f32 %v1571, %v1576
  %v1578 = vmul.f32 %v1572, %v1576
  %v1579 = vlaneseq
  %v1580 = vshrl.u32 %v1579, 7
  %v1581 = vsub.s32 2, %v1580
  %v1582 = vrot.slane %v950, %v1581
  %v1583 = vadd.f32 %v1577, %v1582
  %v1584 = vadd.f32 %v1578, %v1582
  %s1585 = scalar_lea.vmem %s7, 16
  %v1586 = vld [vmem:[%s1585] sm:$0xf]
  %v1587 = vld [vmem:[%s1585 + $0x4] sm:$0xf]
  %v1588 = vld [vmem:[%s1585 + $0x8] sm:$0xf]
  %v1589 = vld [vmem:[%s1585 + $0xc] sm:$0xf]
  %v1590 = vpack.c.bf16 %v1584, %v1583
  %s1591 = scalar_lea.vmem %s8, 1
  %v1592 = vld [vmem:[%s1591] sm:$0x1]
  %v1594 = vlaneseq
  %v1595 = vshrl.u32 %v1594, 7
  %v1596 = vsub.s32 0, %v1595
  %v1597 = vrot.slane %v1592, %v1596
  %v1603 = vunpack.c.l.b16 %v1586
  %v1604 = vunpack.c.l.b16 %v1587
  %v1605 = vunpack.c.l.b16 %v1588
  %v1606 = vunpack.c.l.b16 %v1589
  %v1607 = vpack.c.b16 %v1604, %v1603
  %v1608 = vpack.c.b16 %v1606, %v1605
  %v1612 = vsel %vm54, %v1590, 0
  %1614 = vmatprep.subr.bf16.mxu0 0
  %1615 = vmatpush1.bf16.msra.mxu0 %v1607
  %1616 = vmatprep.subr.bf16.mxu0 0
  %1617 = vmatpush1.bf16.msra.mxu0 %v1608
  %1618 = vmatprep.subr.bf16.mxu0 0
  %1619 = vmatpush1.bf16.msra.mxu0 0
  %1620 = vmatprep.subr.bf16.mxu0 0
  %1621 = vmatpush1.bf16.msra.mxu0 0
  %1622 = vmatprep.subr.bf16.mxu0 0
  %1623 = vmatpush1.bf16.msra.mxu0 0
  %1624 = vmatprep.subr.bf16.mxu0 0
  %1625 = vmatpush1.bf16.msra.mxu0 0
  %1626 = vmatprep.subr.bf16.mxu0 0
  %1627 = vmatpush1.bf16.msra.mxu0 0
  %1628 = vmatprep.subr.bf16.mxu0 0
  %1629 = vmatpush1.bf16.msra.mxu0 0
  %1630 = vmatprep.subr.bf16.mxu0 0
  %1631 = vmatpush1.bf16.msra.mxu0 0
  %1632 = vmatprep.subr.bf16.mxu0 0
  %1633 = vmatpush1.bf16.msra.mxu0 0
  %1634 = vmatprep.subr.bf16.mxu0 0
  %1635 = vmatpush1.bf16.msra.mxu0 0
  %1636 = vmatprep.subr.bf16.mxu0 0
  %1637 = vmatpush1.bf16.msra.mxu0 0
  %1638 = vmatprep.subr.bf16.mxu0 0
  %1639 = vmatpush1.bf16.msra.mxu0 0
  %1640 = vmatprep.subr.bf16.mxu0 0
  %1641 = vmatpush1.bf16.msra.mxu0 0
  %1642 = vmatprep.subr.bf16.mxu0 0
  %1643 = vmatpush1.bf16.msra.mxu0 0
  %1644 = vmatprep.subr.bf16.mxu0 0
  %1645 = vmatpush1.bf16.msra.mxu0 0
  %1646 = vmatprep.mubr.bf16.mxu0 0
  %1647 = vmatmul.mubr.bf16.gmra.mrb[0].mxu0 %v1612
  %v1648 = vpop.f32.mrb[0].mxu0
  %v1649 = vadd.f32 %v1597, %v1648
  %v1650 = vpop.f32.mrb[0].mxu0
  %v1651 = vpop.f32.mrb[0].mxu0
  %v1652 = vadd.f32 %v1597, %v1651
  %v1653 = vpop.f32.mrb[0].mxu0
  %1654 = vdwg.mxu0
  %v1655 = vmul.f32 %v1649, 0.5
  %v1656 = vmul.f32 %v1652, 0.5
  %v1657 = vmul.f32 %v1649, 0.044715
  %v1658 = vmul.f32 %v1652, 0.044715
  %v1659 = vmul.f32 %v1657, %v1649
  %v1660 = vmul.f32 %v1658, %v1652
  %v1661 = vmul.f32 %v1659, %v1649
  %v1662 = vmul.f32 %v1660, %v1652
  %v1663 = vadd.f32 %v1649, %v1661
  %v1664 = vadd.f32 %v1652, %v1662
  %v1665 = vmul.f32 %v1663, 0.7978846
  %v1666 = vmul.f32 %v1664, 0.7978846
  %v1667 = vtanh.pop %v1665
  %v1668 = vtanh.pop %v1666
  %v1669 = vadd.f32 %v1667, 1.0
  %v1670 = vadd.f32 %v1668, 1.0
  %v1671 = vmul.f32 %v1655, %v1669
  %v1672 = vmul.f32 %v1656, %v1670
  %s1673 = scalar_lea.vmem %s9, 32
  %v1674 = vld [vmem:[%s1673] sm:$0xf]
  %v1675 = vld [vmem:[%s1673 + $0x4] sm:$0xf]
  %v1676 = vld [vmem:[%s1673 + $0x8] sm:$0xf]
  %v1677 = vld [vmem:[%s1673 + $0xc] sm:$0xf]
  %v1678 = vld [vmem:[%s1673 + $0x10] sm:$0xf]
  %v1679 = vld [vmem:[%s1673 + $0x14] sm:$0xf]
  %v1680 = vld [vmem:[%s1673 + $0x18] sm:$0xf]
  %v1681 = vld [vmem:[%s1673 + $0x1c] sm:$0xf]
  %v1682 = vpack.c.bf16 %v1672, %v1671
  %v1683 = vlaneseq
  %v1684 = vshrl.u32 %v1683, 7
  %v1685 = vsub.s32 3, %v1684
  %v1686 = vrot.slane %v950, %v1685
  %v1695 = vunpack.c.l.b16 %v1674
  %v1696 = vunpack.c.l.b16 %v1675
  %v1697 = vunpack.c.l.b16 %v1676
  %v1698 = vunpack.c.l.b16 %v1677
  %v1699 = vunpack.c.l.b16 %v1678
  %v1700 = vunpack.c.l.b16 %v1679
  %v1701 = vunpack.c.l.b16 %v1680
  %v1702 = vunpack.c.l.b16 %v1681
  %v1703 = vpack.c.b16 %v1696, %v1695
  %v1704 = vpack.c.b16 %v1698, %v1697
  %v1705 = vpack.c.b16 %v1700, %v1699
  %v1706 = vpack.c.b16 %v1702, %v1701
  %v1712 = vsel %vm864, %v1682, 0
  %1714 = vmatprep.subr.bf16.mxu0 0
  %1715 = vmatpush1.bf16.msra.mxu0 %v1703
  %1716 = vmatprep.subr.bf16.mxu0 0
  %1717 = vmatpush1.bf16.msra.mxu0 %v1704
  %1718 = vmatprep.subr.bf16.mxu0 0
  %1719 = vmatpush1.bf16.msra.mxu0 %v1705
  %1720 = vmatprep.subr.bf16.mxu0 0
  %1721 = vmatpush1.bf16.msra.mxu0 %v1706
  %1722 = vmatprep.subr.bf16.mxu0 0
  %1723 = vmatpush1.bf16.msra.mxu0 0
  %1724 = vmatprep.subr.bf16.mxu0 0
  %1725 = vmatpush1.bf16.msra.mxu0 0
  %1726 = vmatprep.subr.bf16.mxu0 0
  %1727 = vmatpush1.bf16.msra.mxu0 0
  %1728 = vmatprep.subr.bf16.mxu0 0
  %1729 = vmatpush1.bf16.msra.mxu0 0
  %1730 = vmatprep.subr.bf16.mxu0 0
  %1731 = vmatpush1.bf16.msra.mxu0 0
  %1732 = vmatprep.subr.bf16.mxu0 0
  %1733 = vmatpush1.bf16.msra.mxu0 0
  %1734 = vmatprep.subr.bf16.mxu0 0
  %1735 = vmatpush1.bf16.msra.mxu0 0
  %1736 = vmatprep.subr.bf16.mxu0 0
  %1737 = vmatpush1.bf16.msra.mxu0 0
  %1738 = vmatprep.subr.bf16.mxu0 0
  %1739 = vmatpush1.bf16.msra.mxu0 0
  %1740 = vmatprep.subr.bf16.mxu0 0
  %1741 = vmatpush1.bf16.msra.mxu0 0
  %1742 = vmatprep.subr.bf16.mxu0 0
  %1743 = vmatpush1.bf16.msra.mxu0 0
  %1744 = vmatprep.subr.bf16.mxu0 0
  %1745 = vmatpush1.bf16.msra.mxu0 0
  %1746 = vmatprep.mubr.bf16.mxu0 0
  %1747 = vmatmul.mubr.bf16.gmra.mrb[0].mxu0 %v1712
  %v1748 = vpop.f32.mrb[0].mxu0
  %v1749 = vadd.f32 %v1686, %v1748
  %v1750 = vpop.f32.mrb[0].mxu0
  %v1751 = vpop.f32.mrb[0].mxu0
  %v1752 = vadd.f32 %v1686, %v1751
  %v1753 = vpop.f32.mrb[0].mxu0
  %1754 = vdwg.mxu0
  %v1755 = vadd.f32 %v1583, %v1749
  %v1756 = vadd.f32 %v1584, %v1752
  %v1757 = vsel %vm54, %v1755, 0.0
  %1758 = vadd.xlane.f32.xlu0 %v1757
  %v1759 = vpop.xlane.xlu0 %1758
  %v1760 = vsel %vm54, %v1756, 0.0
  %1761 = vadd.xlane.f32.xlu0 %v1760
  %v1762 = vpop.xlane.xlu0 %1761
  %v1763 = vmul.f32 %v1759, %v61
  %v1764 = vmul.f32 %v1762, %v61
  %v1765 = vsub.f32 %v1755, %v1763
  %v1766 = vsub.f32 %v1756, %v1764
  %v1767 = vmul.f32 %v1765, %v1765
  %v1768 = vmul.f32 %v1766, %v1766
  %v1769 = vsel %vm54, %v1767, 0.0
  %1770 = vadd.xlane.f32.xlu0 %v1769
  %v1771 = vpop.xlane.xlu0 %1770
  %v1772 = vsel %vm54, %v1768, 0.0
  %1773 = vadd.xlane.f32.xlu0 %v1772
  %v1774 = vpop.xlane.xlu0 %1773
  %v1775 = vmul.f32 %v1771, %v61
  %v1776 = vmul.f32 %v1774, %v61
  %v1777 = vadd.f32 %v1775, 1e-12
  %v1778 = vadd.f32 %v1776, 1e-12
  %v1779 = vrsqrt.pop %v1777
  %v1780 = vrsqrt.pop %v1778
  %v1781 = vmul.f32 %v1765, %v1779
  %v1782 = vmul.f32 %v1766, %v1780
  %v1783 = vlaneseq
  %v1784 = vshrl.u32 %v1783, 7
  %v1785 = vsub.s32 4, %v1784
  %v1786 = vrot.slane %v950, %v1785
  %v1787 = vmul.f32 %v1781, %v1786
  %v1788 = vmul.f32 %v1782, %v1786
  %v1789 = vlaneseq
  %v1790 = vshrl.u32 %v1789, 7
  %v1791 = vsub.s32 5, %v1790
  %v1792 = vrot.slane %v950, %v1791
  %v1793 = vadd.f32 %v1787, %v1792
  %v1794 = vadd.f32 %v1788, %v1792
  %v1795 = vld [vmem:[%s10] sm:$0xf]
  %v1796 = vld [vmem:[%s10 + $0x4] sm:$0xf]
  %v1797 = vld [vmem:[%s10 + $0x8] sm:$0xf]
  %v1798 = vld [vmem:[%s10 + $0xc] sm:$0xf]
  %v1799 = vpack.c.bf16 %v1793, %v1793
  %v1800 = vpack.c.bf16 %v1794, %v1794
  %v1801 = vld [vmem:[%s11] sm:$0x1]
  %v1803 = vlaneseq
  %v1804 = vshrl.u32 %v1803, 7
  %v1805 = vsub.s32 0, %v1804
  %v1806 = vrot.slane %v1801, %v1805
  %v1810 = vunpack.c.l.b16 %v1799
  %v1811 = vunpack.c.l.b16 %v1800
  %v1812 = vrot.slane %v1811, 7
  %vm1813 = vcmask 1041409
  %v1814 = vsel %vm1813, %v1812, %v1810
  %v1815 = vpack.c.b16 %v1814, %v1814
  %v1820 = vunpack.c.l.b16 %v1795
  %v1821 = vunpack.c.l.b16 %v1796
  %v1822 = vunpack.c.l.b16 %v1797
  %v1823 = vunpack.c.l.b16 %v1798
  %v1824 = vpack.c.b16 %v1821, %v1820
  %v1825 = vpack.c.b16 %v1823, %v1822
  %v1829 = vsel %vm54, %v1815, 0
  %1831 = vmatprep.subr.bf16.mxu0 0
  %1832 = vmatpush1.bf16.msra.mxu0 %v1824
  %1833 = vmatprep.subr.bf16.mxu0 0
  %1834 = vmatpush1.bf16.msra.mxu0 %v1825
  %1835 = vmatprep.subr.bf16.mxu0 0
  %1836 = vmatpush1.bf16.msra.mxu0 0
  %1837 = vmatprep.subr.bf16.mxu0 0
  %1838 = vmatpush1.bf16.msra.mxu0 0
  %1839 = vmatprep.subr.bf16.mxu0 0
  %1840 = vmatpush1.bf16.msra.mxu0 0
  %1841 = vmatprep.subr.bf16.mxu0 0
  %1842 = vmatpush1.bf16.msra.mxu0 0
  %1843 = vmatprep.subr.bf16.mxu0 0
  %1844 = vmatpush1.bf16.msra.mxu0 0
  %1845 = vmatprep.subr.bf16.mxu0 0
  %1846 = vmatpush1.bf16.msra.mxu0 0
  %1847 = vmatprep.subr.bf16.mxu0 0
  %1848 = vmatpush1.bf16.msra.mxu0 0
  %1849 = vmatprep.subr.bf16.mxu0 0
  %1850 = vmatpush1.bf16.msra.mxu0 0
  %1851 = vmatprep.subr.bf16.mxu0 0
  %1852 = vmatpush1.bf16.msra.mxu0 0
  %1853 = vmatprep.subr.bf16.mxu0 0
  %1854 = vmatpush1.bf16.msra.mxu0 0
  %1855 = vmatprep.subr.bf16.mxu0 0
  %1856 = vmatpush1.bf16.msra.mxu0 0
  %1857 = vmatprep.subr.bf16.mxu0 0
  %1858 = vmatpush1.bf16.msra.mxu0 0
  %1859 = vmatprep.subr.bf16.mxu0 0
  %1860 = vmatpush1.bf16.msra.mxu0 0
  %1861 = vmatprep.subr.bf16.mxu0 0
  %1862 = vmatpush1.bf16.msra.mxu0 0
  %1863 = vmatprep.mubr.bf16.mxu0 0
  %1864 = vmatmul.mubr.bf16.gmra.mrb[0].mxu0 %v1829
  %v1865 = vpop.f32.mrb[0].mxu0
  %v1866 = vadd.f32 %v1806, %v1865
  %v1867 = vpop.f32.mrb[0].mxu0
  %v1868 = vpop.f32.mrb[0].mxu0
  %v1869 = vpop.f32.mrb[0].mxu0
  %1870 = vdwg.mxu0
  %v1871 = vtanh.pop %v1866
  %v1872 = vld [vmem:[%s12] sm:$0xf]
  %v1873 = vld [vmem:[%s12 + $0x4] sm:$0xf]
  %v1874 = vld [vmem:[%s12 + $0x8] sm:$0xf]
  %v1875 = vld [vmem:[%s12 + $0xc] sm:$0xf]
  %v1876 = vpack.c.bf16 %v1871, %v1871
  %v1877 = vld [vmem:[%s13] sm:$0x1]
  %v1879 = vlaneseq
  %v1880 = vshrl.u32 %v1879, 7
  %v1881 = vsub.s32 0, %v1880
  %v1882 = vrot.slane %v1877, %v1881
  %v1888 = vunpack.c.l.b16 %v1872
  %v1889 = vunpack.c.l.b16 %v1873
  %v1890 = vunpack.c.l.b16 %v1874
  %v1891 = vunpack.c.l.b16 %v1875
  %v1892 = vpack.c.b16 %v1889, %v1888
  %v1893 = vpack.c.b16 %v1891, %v1890
  %v1897 = vsel %vm54, %v1876, 0
  %1899 = vmatprep.subr.bf16.mxu0 0
  %1900 = vmatpush1.bf16.msra.mxu0 %v1892
  %1901 = vmatprep.subr.bf16.mxu0 0
  %1902 = vmatpush1.bf16.msra.mxu0 %v1893
  %1903 = vmatprep.subr.bf16.mxu0 0
  %1904 = vmatpush1.bf16.msra.mxu0 0
  %1905 = vmatprep.subr.bf16.mxu0 0
  %1906 = vmatpush1.bf16.msra.mxu0 0
  %1907 = vmatprep.subr.bf16.mxu0 0
  %1908 = vmatpush1.bf16.msra.mxu0 0
  %1909 = vmatprep.subr.bf16.mxu0 0
  %1910 = vmatpush1.bf16.msra.mxu0 0
  %1911 = vmatprep.subr.bf16.mxu0 0
  %1912 = vmatpush1.bf16.msra.mxu0 0
  %1913 = vmatprep.subr.bf16.mxu0 0
  %1914 = vmatpush1.bf16.msra.mxu0 0
  %1915 = vmatprep.subr.bf16.mxu0 0
  %1916 = vmatpush1.bf16.msra.mxu0 0
  %1917 = vmatprep.subr.bf16.mxu0 0
  %1918 = vmatpush1.bf16.msra.mxu0 0
  %1919 = vmatprep.subr.bf16.mxu0 0
  %1920 = vmatpush1.bf16.msra.mxu0 0
  %1921 = vmatprep.subr.bf16.mxu0 0
  %1922 = vmatpush1.bf16.msra.mxu0 0
  %1923 = vmatprep.subr.bf16.mxu0 0
  %1924 = vmatpush1.bf16.msra.mxu0 0
  %1925 = vmatprep.subr.bf16.mxu0 0
  %1926 = vmatpush1.bf16.msra.mxu0 0
  %1927 = vmatprep.subr.bf16.mxu0 0
  %1928 = vmatpush1.bf16.msra.mxu0 0
  %1929 = vmatprep.subr.bf16.mxu0 0
  %1930 = vmatpush1.bf16.msra.mxu0 0
  %1931 = vmatprep.mubr.bf16.mxu0 0
  %1932 = vmatmul.mubr.bf16.gmra.mrb[0].mxu0 %v1897
  %v1933 = vpop.f32.mrb[0].mxu0
  %v1934 = vadd.f32 %v1882, %v1933
  %v1935 = vpop.f32.mrb[0].mxu0
  %v1936 = vpop.f32.mrb[0].mxu0
  %v1937 = vpop.f32.mrb[0].mxu0
  %1938 = vdwg.mxu0
  %1939 = vst [vmem:[%s14] sm:$0x3] %v1934
  // Predicated region
  $region58: #{_lambda_.1} parent=0 // pred_check
    _
  $region59: #{_lambda_.1} parent=0 // pred_check_branch
    %1941 = sbr.rel (0) target = $region61
  $region60: #{_lambda_.1} parent=0 // pred_region
    _
  $region61: #{_lambda_.1} parent=0 // pred_fallthru
    _
  // Predicated region
  $region62: #{_lambda_.1} parent=0 // pred_check
    _
  $region63: #{_lambda_.1} parent=0 // pred_check_branch
    %1943 = sbr.rel (0) target = $region65
  $region64: #{_lambda_.1} parent=0 // pred_region
    _
  $region65: #{_lambda_.1} parent=0 // pred_fallthru
    _

</llo_original>
